<compile_context>
chip_gen: v7x
topology: tpu7x:2x2x1
jax: 0.10.0
libtpu: 0.0.40
codegen_flags: <defaults>
</compile_context>

<pallas_src>
import jax
import jax.numpy as jnp
import numpy as np
from jax import lax
from jax.experimental import pallas as pl
from jax.experimental.pallas import tpu as pltpu

PADF = 128        # all feature dims padded to one lane tile
LANE = 128
BIAS_ROWS = 8     # biases padded to one sublane tile

# ---- packed parameter slab layout (row offsets; every block is a multiple of 8 rows) --
_LAYOUT = (("wpool1", PADF), ("bpool1", BIAS_ROWS),
           ("wself1", PADF), ("wneigh1", PADF), ("b1", BIAS_ROWS),
           ("wpool2", PADF), ("bpool2", BIAS_ROWS),
           ("wself2", PADF), ("wneigh2", PADF), ("b2", BIAS_ROWS))
_OFF = {}
_row = 0
for _name, _rows in _LAYOUT:
    _OFF[_name] = _row
    _row += _rows
SLAB_ROWS = _row   # 800


def pack_params(params):
    """Pad each weight/bias to a (rows, 128) tile and stack into one slab (single DMA)."""
    named = dict(zip([n for n, _ in _LAYOUT], params))
    blocks = []
    for name, rows in _LAYOUT:
        w = jnp.asarray(named[name], jnp.float32)
        blk = jnp.zeros((rows, PADF), jnp.float32).at[: w.shape[0], : w.shape[1]].set(w)
        blocks.append(blk)
    return jnp.concatenate(blocks, axis=0)            # (SLAB_ROWS, 128)


def model_kernel(x_ref, adj_ref, s_ref, d_ref, par_ref, out_ref):
    x = x_ref[...]            # (N, 128)  zero-padded node features
    adj = adj_ref[...]        # (N, N)    adj[v, u] = 1 iff edge u -> v

    def sage(h, wp, bp, ws, wn, bo):
        wpool = par_ref[wp:wp + PADF, :]
        bpool = par_ref[bp:bp + 1, :]
        wself = par_ref[ws:ws + PADF, :]
        wneigh = par_ref[wn:wn + PADF, :]
        bias = par_ref[bo:bo + 1, :]
        # p >= 0 (relu), so 0 is the identity of the masked max-pool: non-neighbors
        # contribute 0 and zero-in-degree nodes come out exactly 0 (DGL semantics).
        p = jnp.maximum(
            jnp.dot(h, wpool, preferred_element_type=jnp.float32) + bpool, 0.0)
        neigh = jnp.max(adj[:, :, None] * p[None, :, :], axis=1)          # (N, 128)
        return (jnp.dot(h, wself, preferred_element_type=jnp.float32)
                + jnp.dot(neigh, wneigh, preferred_element_type=jnp.float32)
                + bias)

    h1 = jnp.maximum(
        sage(x, _OFF["wpool1"], _OFF["bpool1"], _OFF["wself1"], _OFF["wneigh1"], _OFF["b1"]),
        0.0)
    h2 = sage(h1, _OFF["wpool2"], _OFF["bpool2"], _OFF["wself2"], _OFF["wneigh2"], _OFF["b2"])

    # DotProductPredictor over the batched (pos ++ neg, padded-to-128) edge list.
    # TODO(synk): for large N/E, replace the one-hot gather matmuls with scalar-prefetched
    # edge indices (PrefetchScalarGridSpec) + dynamic row gathers to avoid O(E*N) traffic.
    hs = jnp.dot(s_ref[...], h2, preferred_element_type=jnp.float32)     # (E_pad, 128)
    hd = jnp.dot(d_ref[...], h2, preferred_element_type=jnp.float32)     # (E_pad, 128)
    z = hs * hd
    ones = jnp.ones((1, z.shape[1]), jnp.float32)
    row = lax.dot_general(ones, z, (((1,), (1,)), ((), ())),
                          preferred_element_type=jnp.float32)            # (1, E_pad)
    out_ref[...] = jnp.broadcast_to(row, out_ref.shape)                  # dense (8, E_pad)


def _model_forward_impl(x, adj, src_pos, dst_pos, src_neg, dst_neg, slab):
    B, N, in_f = x.shape
    e_pos = src_pos.shape[1]
    e_tot = e_pos + src_neg.shape[1]
    e_pad = pl.cdiv(e_tot, LANE) * LANE

    x_pad = jnp.zeros((B, N, PADF), jnp.float32).at[:, :, :in_f].set(x)

    src_all = jnp.concatenate([src_pos, src_neg], axis=1)                # (B, E_tot)
    dst_all = jnp.concatenate([dst_pos, dst_neg], axis=1)
    s_pad = jnp.zeros((B, e_pad, N), jnp.float32).at[:, :e_tot, :].set(
        jax.nn.one_hot(src_all, N, dtype=jnp.float32))
    d_pad = jnp.zeros((B, e_pad, N), jnp.float32).at[:, :e_tot, :].set(
        jax.nn.one_hot(dst_all, N, dtype=jnp.float32))

    out = pl.pallas_call(
        model_kernel,
        out_shape=jax.ShapeDtypeStruct((B, 8, e_pad), jnp.float32),
        grid=(B,),
        in_specs=[
            pl.BlockSpec((None, N, PADF), lambda b: (b, 0, 0)),          # per-graph x
            pl.BlockSpec((None, N, N), lambda b: (b, 0, 0)),             # per-graph adj
            pl.BlockSpec((None, e_pad, N), lambda b: (b, 0, 0)),         # src one-hot
            pl.BlockSpec((None, e_pad, N), lambda b: (b, 0, 0)),         # dst one-hot
            pl.BlockSpec((SLAB_ROWS, PADF), lambda b: (0, 0)),           # params: constant block
        ],
        out_specs=pl.BlockSpec((None, 8, e_pad), lambda b: (b, 0, 0)),
        compiler_params=pltpu.CompilerParams(
            dimension_semantics=("parallel",)),      # shard graphs across TCs on v7x
    )(x_pad, adj, s_pad, d_pad, slab)

    scores = out[:, 0, :]                            # (B, e_pad)
    pos = scores[:, :e_pos, None]                    # (B, E_pos, 1)
    neg = scores[:, e_pos:e_tot, None]               # (B, E_neg, 1)
    return pos, neg


model_forward = jax.jit(_model_forward_impl)


def _sage_ref(h, adj, wpool, bpool, wself, wneigh, b):
    """Pure-JAX reference with literal DGL pool semantics (-inf mask + degree gate)."""
    p = jnp.maximum(h @ wpool + bpool, 0.0)
    deg = jnp.sum(adj, axis=1, keepdims=True)
    masked = jnp.where(adj[:, :, None] > 0.0, p[None, :, :], -jnp.inf)
    neigh = jnp.where(deg > 0.0, jnp.max(masked, axis=1), 0.0)
    return h @ wself + neigh @ wneigh + b


if __name__ == "__main__":
    key = jax.random.PRNGKey(0)
    B, N, IN_F, HID_F, OUT_F = 4, 16, 16, 32, 16
    E_POS, E_NEG = 32, 32
    ks = jax.random.split(key, 16)

    # Per-graph node features and synthetic edge lists (positive edges define adj).
    x = jax.random.normal(ks[0], (B, N, IN_F), jnp.float32)
    src_pos = jax.random.randint(ks[1], (B, E_POS), 0, N)
    dst_pos = jax.random.randint(ks[2], (B, E_POS), 0, N)
    src_neg = jax.random.randint(ks[3], (B, E_NEG), 0, N)
    dst_neg = jax.random.randint(ks[4], (B, E_NEG), 0, N)

    bidx = jnp.broadcast_to(jnp.arange(B)[:, None], (B, E_POS))
    adj = jnp.zeros((B, N, N), jnp.float32).at[bidx, dst_pos, src_pos].set(1.0)

    def lin(k, fin, fout):
        return 0.1 * jax.random.normal(k, (fin, fout), jnp.float32)

    params = (
        # conv1 (in -> hid): fc_pool, pool bias, fc_self, fc_neigh, bias
        lin(ks[5], IN_F, IN_F),
        0.1 * jax.random.normal(ks[6], (1, IN_F), jnp.float32),
        lin(ks[7], IN_F, HID_F),
        lin(ks[8], IN_F, HID_F),
        0.1 * jax.random.normal(ks[9], (1, HID_F), jnp.float32),
        # conv2 (hid -> out)
        lin(ks[10], HID_F, HID_F),
        0.1 * jax.random.normal(ks[11], (1, HID_F), jnp.float32),
        lin(ks[12], HID_F, OUT_F),
        lin(ks[13], HID_F, OUT_F),
        0.1 * jax.random.normal(ks[14], (1, OUT_F), jnp.float32),
    )

    slab = pack_params(params)   # one-time host prep, kept out of the per-call path

    pos, neg = model_forward(x, adj, src_pos, dst_pos, src_neg, dst_neg, slab)
    jax.block_until_ready((pos, neg))

    # Pure-JAX reference check per graph (literal DGL-style math, unfused, unpadded).
    pos_ref, neg_ref = [], []
    for g in range(B):
        h1 = jnp.maximum(_sage_ref(x[g], adj[g], *params[0:5]), 0.0)
        h2 = _sage_ref(h1, adj[g], *params[5:10])
        pos_ref.append(jnp.sum(h2[src_pos[g]] * h2[dst_pos[g]], axis=-1, keepdims=True))
        neg_ref.append(jnp.sum(h2[src_neg[g]] * h2[dst_neg[g]], axis=-1, keepdims=True))
    pos_ref = jnp.stack(pos_ref)
    neg_ref = jnp.stack(neg_ref)

    np.testing.assert_allclose(np.asarray(pos), np.asarray(pos_ref), rtol=1e-3, atol=1e-3)
    np.testing.assert_allclose(np.asarray(neg), np.asarray(neg_ref), rtol=1e-3, atol=1e-3)

    print("KERNEL_OK")
</pallas_src>

<mosaic_0001>
module attributes {stable_mosaic.version = 11 : i64} {
  func.func @model_kernel(%arg0: i32, %arg1: memref<1x16x128xf32, #tpu.memory_space<vmem>>, %arg2: memref<1x16x16xf32, #tpu.memory_space<vmem>>, %arg3: memref<1x128x16xf32, #tpu.memory_space<vmem>>, %arg4: memref<1x128x16xf32, #tpu.memory_space<vmem>>, %arg5: memref<800x128xf32, #tpu.memory_space<vmem>>, %arg6: memref<1x8x128xf32, #tpu.memory_space<vmem>>) attributes {dimension_semantics = [#tpu.dimension_semantics<parallel>], iteration_bounds = array<i64: 4>, scalar_prefetch = 0 : i64, scratch_operands = 0 : i64, tpu.core_type = #tpu.core_type<tc>, window_params = [{transform_indices = @transform_0, window_bounds = array<i64: 1, 16, 128>}, {transform_indices = @transform_1, window_bounds = array<i64: 1, 16, 16>}, {transform_indices = @transform_2, window_bounds = array<i64: 1, 128, 16>}, {transform_indices = @transform_3, window_bounds = array<i64: 1, 128, 16>}, {pipeline_mode = #tpu.pipeline_mode<synchronous>, transform_indices = @transform_4, window_bounds = array<i64: 800, 128>}, {transform_indices = @transform_5, window_bounds = array<i64: 1, 8, 128>}]} {
    %c0 = arith.constant 0 : index
    %c0_0 = arith.constant 0 : index
    %c0_1 = arith.constant 0 : index
    %0 = vector.load %arg1[%c0, %c0_0, %c0_1] : memref<1x16x128xf32, #tpu.memory_space<vmem>>, vector<1x16x128xf32>
    %1 = vector.shape_cast %0 : vector<1x16x128xf32> to vector<16x128xf32>
    %c0_2 = arith.constant 0 : index
    %c0_3 = arith.constant 0 : index
    %c0_4 = arith.constant 0 : index
    %2 = vector.load %arg2[%c0_2, %c0_3, %c0_4] : memref<1x16x16xf32, #tpu.memory_space<vmem>>, vector<1x16x16xf32>
    %3 = vector.shape_cast %2 : vector<1x16x16xf32> to vector<16x16xf32>
    %c0_5 = arith.constant 0 : index
    %c0_6 = arith.constant 0 : index
    %4 = vector.load %arg5[%c0_5, %c0_6] : memref<800x128xf32, #tpu.memory_space<vmem>>, vector<128x128xf32>
    %c128 = arith.constant 128 : index
    %c0_7 = arith.constant 0 : index
    %5 = vector.load %arg5[%c128, %c0_7] : memref<800x128xf32, #tpu.memory_space<vmem>>, vector<1x128xf32>
    %c136 = arith.constant 136 : index
    %c0_8 = arith.constant 0 : index
    %6 = vector.load %arg5[%c136, %c0_8] : memref<800x128xf32, #tpu.memory_space<vmem>>, vector<128x128xf32>
    %c264 = arith.constant 264 : index
    %c0_9 = arith.constant 0 : index
    %7 = vector.load %arg5[%c264, %c0_9] : memref<800x128xf32, #tpu.memory_space<vmem>>, vector<128x128xf32>
    %c392 = arith.constant 392 : index
    %c0_10 = arith.constant 0 : index
    %8 = vector.load %arg5[%c392, %c0_10] : memref<800x128xf32, #tpu.memory_space<vmem>>, vector<1x128xf32>
    %cst = arith.constant dense<0.000000e+00> : vector<16x128xf32>
    %9 = tpu.matmul %1, %4, %cst {dimension_numbers = #tpu.dot_dimension_numbers<[1], [0], [0], [1], [0, 0, 1, 1], [], []>} : vector<16x128xf32>, vector<128x128xf32>, vector<16x128xf32> -> vector<16x128xf32>
    %10 = vector.broadcast %5 : vector<1x128xf32> to vector<16x128xf32>
    %11 = arith.addf %9, %10 : vector<16x128xf32>
    %cst_11 = arith.constant 0.000000e+00 : f32
    %12 = vector.broadcast %cst_11 : f32 to vector<16x128xf32>
    %13 = arith.maximumf %11, %12 : vector<16x128xf32>
    %14 = vector.shape_cast %3 : vector<16x16xf32> to vector<16x16x1xf32>
    %15 = vector.shape_cast %13 : vector<16x128xf32> to vector<1x16x128xf32>
    %16 = vector.broadcast %14 : vector<16x16x1xf32> to vector<16x16x128xf32>
    %17 = vector.broadcast %15 : vector<1x16x128xf32> to vector<16x16x128xf32>
    %18 = arith.mulf %16, %17 : vector<16x16x128xf32>
    %cst_12 = arith.constant dense<0xFF800000> : vector<16x128xf32>
    %19 = vector.multi_reduction <maximumf>, %18, %cst_12 [1] : vector<16x16x128xf32> to vector<16x128xf32>
    %cst_13 = arith.constant dense<0.000000e+00> : vector<16x128xf32>
    %20 = tpu.matmul %1, %6, %cst_13 {dimension_numbers = #tpu.dot_dimension_numbers<[1], [0], [0], [1], [0, 0, 1, 1], [], []>} : vector<16x128xf32>, vector<128x128xf32>, vector<16x128xf32> -> vector<16x128xf32>
    %cst_14 = arith.constant dense<0.000000e+00> : vector<16x128xf32>
    %21 = tpu.matmul %19, %7, %cst_14 {dimension_numbers = #tpu.dot_dimension_numbers<[1], [0], [0], [1], [0, 0, 1, 1], [], []>} : vector<16x128xf32>, vector<128x128xf32>, vector<16x128xf32> -> vector<16x128xf32>
    %22 = arith.addf %20, %21 : vector<16x128xf32>
    %23 = vector.broadcast %8 : vector<1x128xf32> to vector<16x128xf32>
    %24 = arith.addf %22, %23 : vector<16x128xf32>
    %cst_15 = arith.constant 0.000000e+00 : f32
    %25 = vector.broadcast %cst_15 : f32 to vector<16x128xf32>
    %26 = arith.maximumf %24, %25 : vector<16x128xf32>
    %c400 = arith.constant 400 : index
    %c0_16 = arith.constant 0 : index
    %27 = vector.load %arg5[%c400, %c0_16] : memref<800x128xf32, #tpu.memory_space<vmem>>, vector<128x128xf32>
    %c528 = arith.constant 528 : index
    %c0_17 = arith.constant 0 : index
    %28 = vector.load %arg5[%c528, %c0_17] : memref<800x128xf32, #tpu.memory_space<vmem>>, vector<1x128xf32>
    %c536 = arith.constant 536 : index
    %c0_18 = arith.constant 0 : index
    %29 = vector.load %arg5[%c536, %c0_18] : memref<800x128xf32, #tpu.memory_space<vmem>>, vector<128x128xf32>
    %c664 = arith.constant 664 : index
    %c0_19 = arith.constant 0 : index
    %30 = vector.load %arg5[%c664, %c0_19] : memref<800x128xf32, #tpu.memory_space<vmem>>, vector<128x128xf32>
    %c792 = arith.constant 792 : index
    %c0_20 = arith.constant 0 : index
    %31 = vector.load %arg5[%c792, %c0_20] : memref<800x128xf32, #tpu.memory_space<vmem>>, vector<1x128xf32>
    %cst_21 = arith.constant dense<0.000000e+00> : vector<16x128xf32>
    %32 = tpu.matmul %26, %27, %cst_21 {dimension_numbers = #tpu.dot_dimension_numbers<[1], [0], [0], [1], [0, 0, 1, 1], [], []>} : vector<16x128xf32>, vector<128x128xf32>, vector<16x128xf32> -> vector<16x128xf32>
    %33 = vector.broadcast %28 : vector<1x128xf32> to vector<16x128xf32>
    %34 = arith.addf %32, %33 : vector<16x128xf32>
    %cst_22 = arith.constant 0.000000e+00 : f32
    %35 = vector.broadcast %cst_22 : f32 to vector<16x128xf32>
    %36 = arith.maximumf %34, %35 : vector<16x128xf32>
    %37 = vector.shape_cast %3 : vector<16x16xf32> to vector<16x16x1xf32>
    %38 = vector.shape_cast %36 : vector<16x128xf32> to vector<1x16x128xf32>
    %39 = vector.broadcast %37 : vector<16x16x1xf32> to vector<16x16x128xf32>
    %40 = vector.broadcast %38 : vector<1x16x128xf32> to vector<16x16x128xf32>
    %41 = arith.mulf %39, %40 : vector<16x16x128xf32>
    %cst_23 = arith.constant dense<0xFF800000> : vector<16x128xf32>
    %42 = vector.multi_reduction <maximumf>, %41, %cst_23 [1] : vector<16x16x128xf32> to vector<16x128xf32>
    %cst_24 = arith.constant dense<0.000000e+00> : vector<16x128xf32>
    %43 = tpu.matmul %26, %29, %cst_24 {dimension_numbers = #tpu.dot_dimension_numbers<[1], [0], [0], [1], [0, 0, 1, 1], [], []>} : vector<16x128xf32>, vector<128x128xf32>, vector<16x128xf32> -> vector<16x128xf32>
    %cst_25 = arith.constant dense<0.000000e+00> : vector<16x128xf32>
    %44 = tpu.matmul %42, %30, %cst_25 {dimension_numbers = #tpu.dot_dimension_numbers<[1], [0], [0], [1], [0, 0, 1, 1], [], []>} : vector<16x128xf32>, vector<128x128xf32>, vector<16x128xf32> -> vector<16x128xf32>
    %45 = arith.addf %43, %44 : vector<16x128xf32>
    %46 = vector.broadcast %31 : vector<1x128xf32> to vector<16x128xf32>
    %47 = arith.addf %45, %46 : vector<16x128xf32>
    %c0_26 = arith.constant 0 : index
    %c0_27 = arith.constant 0 : index
    %c0_28 = arith.constant 0 : index
    %48 = vector.load %arg3[%c0_26, %c0_27, %c0_28] : memref<1x128x16xf32, #tpu.memory_space<vmem>>, vector<1x128x16xf32>
    %49 = vector.shape_cast %48 : vector<1x128x16xf32> to vector<128x16xf32>
    %cst_29 = arith.constant dense<0.000000e+00> : vector<128x128xf32>
    %50 = tpu.matmul %49, %47, %cst_29 {dimension_numbers = #tpu.dot_dimension_numbers<[1], [0], [0], [1], [0, 0, 1, 1], [], []>} : vector<128x16xf32>, vector<16x128xf32>, vector<128x128xf32> -> vector<128x128xf32>
    %c0_30 = arith.constant 0 : index
    %c0_31 = arith.constant 0 : index
    %c0_32 = arith.constant 0 : index
    %51 = vector.load %arg4[%c0_30, %c0_31, %c0_32] : memref<1x128x16xf32, #tpu.memory_space<vmem>>, vector<1x128x16xf32>
    %52 = vector.shape_cast %51 : vector<1x128x16xf32> to vector<128x16xf32>
    %cst_33 = arith.constant dense<0.000000e+00> : vector<128x128xf32>
    %53 = tpu.matmul %52, %47, %cst_33 {dimension_numbers = #tpu.dot_dimension_numbers<[1], [0], [0], [1], [0, 0, 1, 1], [], []>} : vector<128x16xf32>, vector<16x128xf32>, vector<128x128xf32> -> vector<128x128xf32>
    %54 = arith.mulf %50, %53 : vector<128x128xf32>
    %cst_34 = arith.constant 1.000000e+00 : f32
    %55 = vector.broadcast %cst_34 : f32 to vector<1x128xf32>
    %cst_35 = arith.constant dense<0.000000e+00> : vector<1x128xf32>
    %56 = tpu.matmul %55, %54, %cst_35 {dimension_numbers = #tpu.dot_dimension_numbers<[1], [1], [0], [0], [0, 0, 1, 0], [], []>} : vector<1x128xf32>, vector<128x128xf32>, vector<1x128xf32> -> vector<1x128xf32>
    %57 = vector.shape_cast %56 : vector<1x128xf32> to vector<1x128xf32>
    %58 = vector.broadcast %57 : vector<1x128xf32> to vector<8x128xf32>
    %c0_36 = arith.constant 0 : index
    %c0_37 = arith.constant 0 : index
    %c0_38 = arith.constant 0 : index
    %59 = vector.load %arg6[%c0_36, %c0_37, %c0_38] : memref<1x8x128xf32, #tpu.memory_space<vmem>>, vector<1x8x128xf32>
    %60 = vector.shape_cast %59 : vector<1x8x128xf32> to vector<8x128xf32>
    %61 = vector.shape_cast %58 : vector<8x128xf32> to vector<1x8x128xf32>
    tpu.vector_store %arg6[%c0_36, %c0_37, %c0_38], %61 {strides = array<i32>} : memref<1x8x128xf32, #tpu.memory_space<vmem>>, vector<1x8x128xf32>,
    return
  }
  func.func @transform_0(%arg0: i32) -> (i32, i32, i32) {
    %c0_i32 = arith.constant 0 : i32
    %c0_i32_0 = arith.constant 0 : i32
    %c0_i32_1 = arith.constant 0 : i32
    return %arg0, %c0_i32, %c0_i32_0 : i32, i32, i32
  }
  func.func @transform_1(%arg0: i32) -> (i32, i32, i32) {
    %c0_i32 = arith.constant 0 : i32
    %c0_i32_0 = arith.constant 0 : i32
    %c0_i32_1 = arith.constant 0 : i32
    return %arg0, %c0_i32, %c0_i32_0 : i32, i32, i32
  }
  func.func @transform_2(%arg0: i32) -> (i32, i32, i32) {
    %c0_i32 = arith.constant 0 : i32
    %c0_i32_0 = arith.constant 0 : i32
    %c0_i32_1 = arith.constant 0 : i32
    return %arg0, %c0_i32, %c0_i32_0 : i32, i32, i32
  }
  func.func @transform_3(%arg0: i32) -> (i32, i32, i32) {
    %c0_i32 = arith.constant 0 : i32
    %c0_i32_0 = arith.constant 0 : i32
    %c0_i32_1 = arith.constant 0 : i32
    return %arg0, %c0_i32, %c0_i32_0 : i32, i32, i32
  }
  func.func @transform_4(%arg0: i32) -> (i32, i32) {
    %c0_i32 = arith.constant 0 : i32
    %c0_i32_0 = arith.constant 0 : i32
    %c0_i32_1 = arith.constant 0 : i32
    return %c0_i32, %c0_i32_0 : i32, i32
  }
  func.func @transform_5(%arg0: i32) -> (i32, i32, i32) {
    %c0_i32 = arith.constant 0 : i32
    %c0_i32_0 = arith.constant 0 : i32
    %c0_i32_1 = arith.constant 0 : i32
    return %arg0, %c0_i32, %c0_i32_0 : i32, i32, i32
  }
}

</mosaic_0001>

<llo_original>
// kernel: _model_forward_impl.1
$region0: #{_model_forward_impl.1}
  #allocation0 [shape = 'u32[]', space=smem, size = 0x4, offset = 0x4, fixed_abs, tag = 'smem constant byte address 0x4 - core index']
  #allocation1 [shape = 'u32[144,128]{1,0:T(1,128)}', space=vmem, size = 0x12000, scoped, tag = 'internal scratch']
  %s0 = inlined_call_operand.vmem [shape: f32[4,16,128], index: 0, kind: input, shape index: {}]
  %s1 = inlined_call_operand.vmem [shape: f32[4,16,16], index: 1, kind: input, shape index: {}]
  %s2 = inlined_call_operand.vmem [shape: f32[4,128,16], index: 2, kind: input, shape index: {}]
  %s3 = inlined_call_operand.vmem [shape: f32[4,128,16], index: 3, kind: input, shape index: {}]
  %s4 = inlined_call_operand.vmem [shape: f32[800,128], index: 4, kind: input, shape index: {}]
  %s5 = inlined_call_operand.vmem [shape: f32[4,8,128], index: 5, kind: output, shape index: {}]
  %s6 = sld [smem:[#allocation0]]
  $region53: #{_model_forward_impl.1} parent=0
    _
  %s8 = ssub.s32 1, %s6
  %s9 = scalar_select 0, %s8, %s6
  loop: start=0, step=1, limit=6
  $region2: #{_model_forward_impl.1} parent=0 // loop_pre_header
    _
  $region3: #{_model_forward_impl.1} parent=0 // loop_header
    %s11 = sphi 0, %s15
    %p12 = scmp.ge.s32.totalorder %s11, 6
    %s21 = sphi 0, %s23
    %s24 = sphi 0, %s21
    %s25 = sphi 0, %s24
    %s41 = sphi 0, %s25
    %s47 = sphi 0, %s49
    %s50 = sphi 0, %s47
    %s51 = sphi 0, %s50
    %s67 = sphi 0, %s51
    %s73 = sphi 0, %s75
    %s76 = sphi 0, %s73
    %s77 = sphi 0, %s76
    %s93 = sphi 0, %s77
    %s99 = sphi 0, %s101
    %s102 = sphi 0, %s99
    %s103 = sphi 0, %s102
    %s119 = sphi 0, %s103
    %s123 = sphi 0, %s123
    %s125 = sphi 0, %s123
    %s126 = sphi 0, %s125
    %s140 = sphi 0, %s126
    %s146 = sphi 0, %s148
    %s149 = sphi 0, %s146
    %s150 = sphi 0, %s149
    %s166 = sphi 0, %s150
  $region4: #{_model_forward_impl.1} parent=0 // loop_header_branch
    %14 = sbr.rel (%p12) target = $region8
  $region5: #{_model_forward_impl.1} parent=0 // loop_body
    %s16 = ssub.s32 %s11, 1
    %s17 = ssub.s32 %s11, 2
    %s18 = sadd.s32 %s11, 1
    %s19 = ssub.s32 %s11, %s18
    %p20 = scmp.eq.s32.totalorder %s19, 0
    %s22 = sadd.s32 %s21, 1
    %s23 = scalar_select %p20, %s21, %s22
    %p26 = pneg %p20
    %p27 = scmp.eq.s32.totalorder %s11, 3
    %p28 = por %p26, %p27
    %p29 = scmp.ne.s32.totalorder %s21, %s24
    %p30 = scmp.eq.s32.totalorder %s11, 0
    %p31 = por %p29, %p30
    %p32 = scmp.ne.s32.totalorder %s21, %s24
    %p33 = scmp.eq.s32.totalorder %s16, 3
    %p34 = por %p32, %p33
    %p35 = scmp.ne.s32.totalorder %s24, %s25
    %p36 = scmp.eq.s32.totalorder %s16, 0
    %p37 = por %p35, %p36
    %p38 = scmp.ne.s32.totalorder %s24, %s25
    %p39 = scmp.eq.s32.totalorder %s17, 3
    %p40 = por %p38, %p39
    %p42 = scmp.ne.s32.totalorder %s25, %s41
    %p43 = scmp.eq.s32.totalorder %s17, 0
    %p44 = por %p42, %p43
    %s45 = ssub.s32 %s11, %s18
    %p46 = scmp.eq.s32.totalorder %s45, 0
    %s48 = sadd.s32 %s47, 1
    %s49 = scalar_select %p46, %s47, %s48
    %p52 = pneg %p46
    %p53 = scmp.eq.s32.totalorder %s11, 3
    %p54 = por %p52, %p53
    %p55 = scmp.ne.s32.totalorder %s47, %s50
    %p56 = scmp.eq.s32.totalorder %s11, 0
    %p57 = por %p55, %p56
    %p58 = scmp.ne.s32.totalorder %s47, %s50
    %p59 = scmp.eq.s32.totalorder %s16, 3
    %p60 = por %p58, %p59
    %p61 = scmp.ne.s32.totalorder %s50, %s51
    %p62 = scmp.eq.s32.totalorder %s16, 0
    %p63 = por %p61, %p62
    %p64 = scmp.ne.s32.totalorder %s50, %s51
    %p65 = scmp.eq.s32.totalorder %s17, 3
    %p66 = por %p64, %p65
    %p68 = scmp.ne.s32.totalorder %s51, %s67
    %p69 = scmp.eq.s32.totalorder %s17, 0
    %p70 = por %p68, %p69
    %s71 = ssub.s32 %s11, %s18
    %p72 = scmp.eq.s32.totalorder %s71, 0
    %s74 = sadd.s32 %s73, 1
    %s75 = scalar_select %p72, %s73, %s74
    %p78 = pneg %p72
    %p79 = scmp.eq.s32.totalorder %s11, 3
    %p80 = por %p78, %p79
    %p81 = scmp.ne.s32.totalorder %s73, %s76
    %p82 = scmp.eq.s32.totalorder %s11, 0
    %p83 = por %p81, %p82
    %p84 = scmp.ne.s32.totalorder %s73, %s76
    %p85 = scmp.eq.s32.totalorder %s16, 3
    %p86 = por %p84, %p85
    %p87 = scmp.ne.s32.totalorder %s76, %s77
    %p88 = scmp.eq.s32.totalorder %s16, 0
    %p89 = por %p87, %p88
    %p90 = scmp.ne.s32.totalorder %s76, %s77
    %p91 = scmp.eq.s32.totalorder %s17, 3
    %p92 = por %p90, %p91
    %p94 = scmp.ne.s32.totalorder %s77, %s93
    %p95 = scmp.eq.s32.totalorder %s17, 0
    %p96 = por %p94, %p95
    %s97 = ssub.s32 %s11, %s18
    %p98 = scmp.eq.s32.totalorder %s97, 0
    %s100 = sadd.s32 %s99, 1
    %s101 = scalar_select %p98, %s99, %s100
    %p104 = pneg %p98
    %p105 = scmp.eq.s32.totalorder %s11, 3
    %p106 = por %p104, %p105
    %p107 = scmp.ne.s32.totalorder %s99, %s102
    %p108 = scmp.eq.s32.totalorder %s11, 0
    %p109 = por %p107, %p108
    %p110 = scmp.ne.s32.totalorder %s99, %s102
    %p111 = scmp.eq.s32.totalorder %s16, 3
    %p112 = por %p110, %p111
    %p113 = scmp.ne.s32.totalorder %s102, %s103
    %p114 = scmp.eq.s32.totalorder %s16, 0
    %p115 = por %p113, %p114
    %p116 = scmp.ne.s32.totalorder %s102, %s103
    %p117 = scmp.eq.s32.totalorder %s17, 3
    %p118 = por %p116, %p117
    %p120 = scmp.ne.s32.totalorder %s103, %s119
    %p121 = scmp.eq.s32.totalorder %s17, 0
    %p122 = por %p120, %p121
    %s124 = sadd.s32 %s123, 1
    %p127 = scmp.eq.s32.totalorder %s11, 3
    %p128 = scmp.ne.s32.totalorder %s123, %s125
    %p129 = scmp.eq.s32.totalorder %s11, 0
    %p130 = por %p128, %p129
    %p131 = scmp.ne.s32.totalorder %s123, %s125
    %p132 = scmp.eq.s32.totalorder %s16, 3
    %p133 = por %p131, %p132
    %p134 = scmp.ne.s32.totalorder %s125, %s126
    %p135 = scmp.eq.s32.totalorder %s16, 0
    %p136 = por %p134, %p135
    %p137 = scmp.ne.s32.totalorder %s125, %s126
    %p138 = scmp.eq.s32.totalorder %s17, 3
    %p139 = por %p137, %p138
    %p141 = scmp.ne.s32.totalorder %s126, %s140
    %p142 = scmp.eq.s32.totalorder %s17, 0
    %p143 = por %p141, %p142
    %s144 = ssub.s32 %s11, %s18
    %p145 = scmp.eq.s32.totalorder %s144, 0
    %s147 = sadd.s32 %s146, 1
    %s148 = scalar_select %p145, %s146, %s147
    %p151 = pneg %p145
    %p152 = scmp.eq.s32.totalorder %s11, 3
    %p153 = por %p151, %p152
    %p154 = scmp.ne.s32.totalorder %s146, %s149
    %p155 = scmp.eq.s32.totalorder %s11, 0
    %p156 = por %p154, %p155
    %p157 = scmp.ne.s32.totalorder %s146, %s149
    %p158 = scmp.eq.s32.totalorder %s16, 3
    %p159 = por %p157, %p158
    %p160 = scmp.ne.s32.totalorder %s149, %s150
    %p161 = scmp.eq.s32.totalorder %s16, 0
    %p162 = por %p160, %p161
    %p163 = scmp.ne.s32.totalorder %s149, %s150
    %p164 = scmp.eq.s32.totalorder %s17, 3
    %p165 = por %p163, %p164
    %p167 = scmp.ne.s32.totalorder %s150, %s166
    %p168 = scmp.eq.s32.totalorder %s17, 0
    %p169 = por %p167, %p168
    %p170 = scmp.le.s32.totalorder 1, %s11
    %p171 = scmp.lt.s32.totalorder %s11, 5
    %p172 = pnand %p170, %p171
    %p173 = pneg %p172
    // Predicated region
    $region9: #{_model_forward_impl.1} parent=5 // pred_check
      _
    $region10: #{_model_forward_impl.1} parent=5 // pred_check_branch
      %175 = sbr.rel (%p172) target = $region12
    $region11: #{_model_forward_impl.1} parent=5 // pred_region
      %s176 = ssub.s32 %s11, 1
      // Predicated region
      $region13: #{_model_forward_impl.1} parent=11 // pred_check
        %p177 = pneg %p136
      $region14: #{_model_forward_impl.1} parent=11 // pred_check_branch
        %179 = sbr.rel (%p177) target = $region16
      $region15: #{_model_forward_impl.1} parent=11 // pred_region
        _
      $region16: #{_model_forward_impl.1} parent=11 // pred_fallthru
        _
    $region12: #{_model_forward_impl.1} parent=5 // pred_fallthru
      _
    %p180 = scmp.lt.s32.totalorder %s11, 4
    // Predicated region
    $region17: #{_model_forward_impl.1} parent=5 // pred_check
      %p181 = pneg %p180
    $region18: #{_model_forward_impl.1} parent=5 // pred_check_branch
      %183 = sbr.rel (%p181) target = $region20
    $region19: #{_model_forward_impl.1} parent=5 // pred_region
      // Predicated region
      $region21: #{_model_forward_impl.1} parent=19 // pred_check
        %p184 = pneg %p31
      $region22: #{_model_forward_impl.1} parent=19 // pred_check_branch
        %186 = sbr.rel (%p184) target = $region24
      $region23: #{_model_forward_impl.1} parent=19 // pred_region
        %p187 = scmp.lt.s32.totalorder %s11, 3
        %s188 = scalar_select %p187, %s11, 3
        %s189 = smul.addr %s188, 2
        %s190 = smul.addr %s189, 8
        %s191 = scalar_lea.vmem %s0, %s190
      $region24: #{_model_forward_impl.1} parent=19 // pred_fallthru
        _
      // Predicated region
      $region25: #{_model_forward_impl.1} parent=19 // pred_check
        %p192 = pneg %p57
      $region26: #{_model_forward_impl.1} parent=19 // pred_check_branch
        %194 = sbr.rel (%p192) target = $region28
      $region27: #{_model_forward_impl.1} parent=19 // pred_region
        %p195 = scmp.lt.s32.totalorder %s11, 3
        %s196 = scalar_select %p195, %s11, 3
        %s197 = smul.addr %s196, 2
        %s198 = smul.addr %s197, 8
        %s199 = scalar_lea.vmem %s1, %s198
      $region28: #{_model_forward_impl.1} parent=19 // pred_fallthru
        _
      // Predicated region
      $region29: #{_model_forward_impl.1} parent=19 // pred_check
        %p200 = pneg %p83
      $region30: #{_model_forward_impl.1} parent=19 // pred_check_branch
        %202 = sbr.rel (%p200) target = $region32
      $region31: #{_model_forward_impl.1} parent=19 // pred_region
        %p203 = scmp.lt.s32.totalorder %s11, 3
        %s204 = scalar_select %p203, %s11, 3
        %s205 = smul.addr %s204, 16
        %s206 = smul.addr %s205, 8
        %s207 = scalar_lea.vmem %s2, %s206
      $region32: #{_model_forward_impl.1} parent=19 // pred_fallthru
        _
      // Predicated region
      $region33: #{_model_forward_impl.1} parent=19 // pred_check
        %p208 = pneg %p109
      $region34: #{_model_forward_impl.1} parent=19 // pred_check_branch
        %210 = sbr.rel (%p208) target = $region36
      $region35: #{_model_forward_impl.1} parent=19 // pred_region
        %p211 = scmp.lt.s32.totalorder %s11, 3
        %s212 = scalar_select %p211, %s11, 3
        %s213 = smul.addr %s212, 16
        %s214 = smul.addr %s213, 8
        %s215 = scalar_lea.vmem %s3, %s214
      $region36: #{_model_forward_impl.1} parent=19 // pred_fallthru
        _
    $region20: #{_model_forward_impl.1} parent=5 // pred_fallthru
      _
    %p216 = scmp.le.s32.totalorder 1, %s11
    %p217 = scmp.lt.s32.totalorder %s11, 5
    %p218 = pnand %p216, %p217
    %p219 = pneg %p218
    // Predicated region
    $region37: #{_model_forward_impl.1} parent=5 // pred_check
      _
    $region38: #{_model_forward_impl.1} parent=5 // pred_check_branch
      %221 = sbr.rel (%p218) target = $region40
    $region39: #{_model_forward_impl.1} parent=5 // pred_region
      %s222 = ssub.s32 %s11, 1
      %p223 = scmp.lt.s32.totalorder %s16, 3
      %s224 = scalar_select %p223, %s16, 3
      %s225 = smul.addr %s224, 2
      %s226 = smul.addr %s225, 8
      %s227 = scalar_lea.vmem %s0, %s226
      %p228 = pneg %p37
      %p229 = pneg %p34
      %p230 = scmp.lt.s32.totalorder %s16, 3
      %s231 = scalar_select %p230, %s16, 3
      %s232 = smul.addr %s231, 2
      %s233 = smul.addr %s232, 8
      %s234 = scalar_lea.vmem %s1, %s233
      %p235 = pneg %p63
      %p236 = pneg %p60
      %p237 = scmp.lt.s32.totalorder %s16, 3
      %s238 = scalar_select %p237, %s16, 3
      %s239 = smul.addr %s238, 16
      %s240 = smul.addr %s239, 8
      %s241 = scalar_lea.vmem %s2, %s240
      %p242 = pneg %p89
      %p243 = pneg %p86
      %p244 = scmp.lt.s32.totalorder %s16, 3
      %s245 = scalar_select %p244, %s16, 3
      %s246 = smul.addr %s245, 16
      %s247 = smul.addr %s246, 8
      %s248 = scalar_lea.vmem %s3, %s247
      %p249 = pneg %p115
      %p250 = pneg %p112
      %p251 = pneg %p136
      %p252 = pneg %p133
      %p253 = pneg %p162
      %p254 = pneg %p159
      %p255 = scmp.lt.s32.totalorder %s16, 3
      %s256 = scalar_select %p255, %s16, 3
      %s257 = smul.addr %s256, 8
      %s258 = scalar_lea.vmem %s5, %s257
      %p259 = scmp.lt.s32.totalorder %s16, 3
      %s260 = scalar_select %p259, %s16, 3
      %s261 = smul.addr %s260, 2
      %s262 = smul.addr %s261, 8
      %s263 = scalar_lea.vmem %s0, %s262
      %p264 = scmp.lt.s32.totalorder %s16, 3
      %s265 = scalar_select %p264, %s16, 3
      %s266 = smul.addr %s265, 2
      %s267 = smul.addr %s266, 8
      %s268 = scalar_lea.vmem %s1, %s267
      %p269 = scmp.lt.s32.totalorder %s16, 3
      %s270 = scalar_select %p269, %s16, 3
      %s271 = smul.addr %s270, 16
      %s272 = smul.addr %s271, 8
      %s273 = scalar_lea.vmem %s2, %s272
      %p274 = scmp.lt.s32.totalorder %s16, 3
      %s275 = scalar_select %p274, %s16, 3
      %s276 = smul.addr %s275, 16
      %s277 = smul.addr %s276, 8
      %s278 = scalar_lea.vmem %s3, %s277
      %p279 = scmp.lt.s32.totalorder %s16, 3
      %s280 = scalar_select %p279, %s16, 3
      %s281 = smul.addr %s280, 8
      %s282 = scalar_lea.vmem %s5, %s281
      %v283 = vld [vmem:[%s263] sm:$0xff]
      %v284 = vld [vmem:[%s263 + $0x8] sm:$0xff]
      %v285 = vld [vmem:[%s268] sm:$0xff]
      %v286 = vld [vmem:[%s268 + $0x8] sm:$0xff]
      %v287 = vld [vmem:[%s4] sm:$0xff]
      %v288 = vld [vmem:[%s4 + $0x8] sm:$0xff]
      %v289 = vld [vmem:[%s4 + $0x10] sm:$0xff]
      %v290 = vld [vmem:[%s4 + $0x18] sm:$0xff]
      %v291 = vld [vmem:[%s4 + $0x20] sm:$0xff]
      %v292 = vld [vmem:[%s4 + $0x28] sm:$0xff]
      %v293 = vld [vmem:[%s4 + $0x30] sm:$0xff]
      %v294 = vld [vmem:[%s4 + $0x38] sm:$0xff]
      %v295 = vld [vmem:[%s4 + $0x40] sm:$0xff]
      %v296 = vld [vmem:[%s4 + $0x48] sm:$0xff]
      %v297 = vld [vmem:[%s4 + $0x50] sm:$0xff]
      %v298 = vld [vmem:[%s4 + $0x58] sm:$0xff]
      %v299 = vld [vmem:[%s4 + $0x60] sm:$0xff]
      %v300 = vld [vmem:[%s4 + $0x68] sm:$0xff]
      %v301 = vld [vmem:[%s4 + $0x70] sm:$0xff]
      %v302 = vld [vmem:[%s4 + $0x78] sm:$0xff]
      %v303 = vld [vmem:[%s4 + $0x80] sm:$0x1]
      %v304 = vld [vmem:[%s4 + $0x88] sm:$0xff]
      %v305 = vld [vmem:[%s4 + $0x90] sm:$0xff]
      %v306 = vld [vmem:[%s4 + $0x98] sm:$0xff]
      %v307 = vld [vmem:[%s4 + $0xa0] sm:$0xff]
      %v308 = vld [vmem:[%s4 + $0xa8] sm:$0xff]
      %v309 = vld [vmem:[%s4 + $0xb0] sm:$0xff]
      %v310 = vld [vmem:[%s4 + $0xb8] sm:$0xff]
      %v311 = vld [vmem:[%s4 + $0xc0] sm:$0xff]
      %v312 = vld [vmem:[%s4 + $0xc8] sm:$0xff]
      %v313 = vld [vmem:[%s4 + $0xd0] sm:$0xff]
      %v314 = vld [vmem:[%s4 + $0xd8] sm:$0xff]
      %v315 = vld [vmem:[%s4 + $0xe0] sm:$0xff]
      %v316 = vld [vmem:[%s4 + $0xe8] sm:$0xff]
      %v317 = vld [vmem:[%s4 + $0xf0] sm:$0xff]
      %v318 = vld [vmem:[%s4 + $0xf8] sm:$0xff]
      %v319 = vld [vmem:[%s4 + $0x100] sm:$0xff]
      %v320 = vld [vmem:[%s4 + $0x108] sm:$0xff]
      %v321 = vld [vmem:[%s4 + $0x110] sm:$0xff]
      %v322 = vld [vmem:[%s4 + $0x118] sm:$0xff]
      %v323 = vld [vmem:[%s4 + $0x120] sm:$0xff]
      %v324 = vld [vmem:[%s4 + $0x128] sm:$0xff]
      %v325 = vld [vmem:[%s4 + $0x130] sm:$0xff]
      %v326 = vld [vmem:[%s4 + $0x138] sm:$0xff]
      %v327 = vld [vmem:[%s4 + $0x140] sm:$0xff]
      %v328 = vld [vmem:[%s4 + $0x148] sm:$0xff]
      %v329 = vld [vmem:[%s4 + $0x150] sm:$0xff]
      %v330 = vld [vmem:[%s4 + $0x158] sm:$0xff]
      %v331 = vld [vmem:[%s4 + $0x160] sm:$0xff]
      %v332 = vld [vmem:[%s4 + $0x168] sm:$0xff]
      %v333 = vld [vmem:[%s4 + $0x170] sm:$0xff]
      %v334 = vld [vmem:[%s4 + $0x178] sm:$0xff]
      %v335 = vld [vmem:[%s4 + $0x180] sm:$0xff]
      %v336 = vld [vmem:[%s4 + $0x188] sm:$0x1]
      %v337 = vlaneseq
      %v338 = vshrl.u32 %v337, 7
      %v339 = vsub.s32 0, %v338
      %v340 = vrot.slane %v303, %v339
      %341 = vmatprep.subr.mxu0 0.0
      %342 = vmatpush1.msra.mxu0 %v287
      %343 = vmatprep.subr.mxu0 0.0
      %344 = vmatpush1.msra.mxu0 %v288
      %345 = vmatprep.subr.mxu0 0.0
      %346 = vmatpush1.msra.mxu0 %v289
      %347 = vmatprep.subr.mxu0 0.0
      %348 = vmatpush1.msra.mxu0 %v290
      %349 = vmatprep.subr.mxu0 0.0
      %350 = vmatpush1.msra.mxu0 %v291
      %351 = vmatprep.subr.mxu0 0.0
      %352 = vmatpush1.msra.mxu0 %v292
      %353 = vmatprep.subr.mxu0 0.0
      %354 = vmatpush1.msra.mxu0 %v293
      %355 = vmatprep.subr.mxu0 0.0
      %356 = vmatpush1.msra.mxu0 %v294
      %357 = vmatprep.subr.mxu0 0.0
      %358 = vmatpush1.msra.mxu0 %v295
      %359 = vmatprep.subr.mxu0 0.0
      %360 = vmatpush1.msra.mxu0 %v296
      %361 = vmatprep.subr.mxu0 0.0
      %362 = vmatpush1.msra.mxu0 %v297
      %363 = vmatprep.subr.mxu0 0.0
      %364 = vmatpush1.msra.mxu0 %v298
      %365 = vmatprep.subr.mxu0 0.0
      %366 = vmatpush1.msra.mxu0 %v299
      %367 = vmatprep.subr.mxu0 0.0
      %368 = vmatpush1.msra.mxu0 %v300
      %369 = vmatprep.subr.mxu0 0.0
      %370 = vmatpush1.msra.mxu0 %v301
      %371 = vmatprep.subr.mxu0 0.0
      %372 = vmatpush1.msra.mxu0 %v302
      %373 = vmatprep.subr.mxu0 0.0
      %374 = vmatpush1.msra.mxu0 0.0
      %375 = vmatprep.subr.mxu0 0.0
      %376 = vmatpush1.msra.mxu0 0.0
      %377 = vmatprep.subr.mxu0 0.0
      %378 = vmatpush1.msra.mxu0 0.0
      %379 = vmatprep.subr.mxu0 0.0
      %380 = vmatpush1.msra.mxu0 0.0
      %381 = vmatprep.subr.mxu0 0.0
      %382 = vmatpush1.msra.mxu0 0.0
      %383 = vmatprep.subr.mxu0 0.0
      %384 = vmatpush1.msra.mxu0 0.0
      %385 = vmatprep.subr.mxu0 0.0
      %386 = vmatpush1.msra.mxu0 0.0
      %387 = vmatprep.subr.mxu0 0.0
      %388 = vmatpush1.msra.mxu0 0.0
      %389 = vmatprep.subr.mxu0 0.0
      %390 = vmatpush1.msra.mxu0 0.0
      %391 = vmatprep.subr.mxu0 0.0
      %392 = vmatpush1.msra.mxu0 0.0
      %393 = vmatprep.subr.mxu0 0.0
      %394 = vmatpush1.msra.mxu0 0.0
      %395 = vmatprep.subr.mxu0 0.0
      %396 = vmatpush1.msra.mxu0 0.0
      %397 = vmatprep.subr.mxu0 0.0
      %398 = vmatpush1.msra.mxu0 0.0
      %399 = vmatprep.subr.mxu0 0.0
      %400 = vmatpush1.msra.mxu0 0.0
      %401 = vmatprep.subr.mxu0 0.0
      %402 = vmatpush1.msra.mxu0 0.0
      %403 = vmatprep.subr.mxu0 0.0
      %404 = vmatpush1.msra.mxu0 0.0
      %405 = vmatprep.mubr.f32.mxu0 0.0
      %406 = vmatmul.mubr.f32.gmra.mrb[0].mxu0 %v283
      %v407 = vpop.f32.mrb[0].mxu0
      %v408 = vadd.f32 %v340, %v407
      %v409 = vpop.f32.mrb[0].mxu0
      %410 = vmatprep.mubr.f32.mxu0 0.0
      %411 = vmatmul.mubr.f32.gmra.mrb[0].mxu0 %v284
      %v412 = vpop.f32.mrb[0].mxu0
      %v413 = vadd.f32 %v340, %v412
      %v414 = vpop.f32.mrb[0].mxu0
      %415 = vdwg.mxu0
      %v416 = vmax.f32 %v408, 0.0
      %v417 = vmax.f32 %v413, 0.0
      %v418 = vlaneseq
      %v419 = vshrl.u32 %v418, 7
      %v420 = vsub.s32 0, %v419
      %v421 = vrot.slane %v285, %v420
      %423 = vbcast.lane.b32.xlu0 %v421, 256
      %v424 = vpop.permute.xlu0 %423
      %s426 = sor.u32 256, 8
      %427 = vbcast.lane.b32.xlu0 %v421, %s426
      %v428 = vpop.permute.xlu0 %427
      %v429 = vlaneseq
      %v430 = vshrl.u32 %v429, 7
      %v431 = vsub.s32 1, %v430
      %v432 = vrot.slane %v285, %v431
      %434 = vbcast.lane.b32.xlu0 %v432, 256
      %v435 = vpop.permute.xlu0 %434
      %s437 = sor.u32 256, 8
      %438 = vbcast.lane.b32.xlu0 %v432, %s437
      %v439 = vpop.permute.xlu0 %438
      %v440 = vlaneseq
      %v441 = vshrl.u32 %v440, 7
      %v442 = vsub.s32 2, %v441
      %v443 = vrot.slane %v285, %v442
      %445 = vbcast.lane.b32.xlu0 %v443, 256
      %v446 = vpop.permute.xlu0 %445
      %s448 = sor.u32 256, 8
      %449 = vbcast.lane.b32.xlu0 %v443, %s448
      %v450 = vpop.permute.xlu0 %449
      %v451 = vlaneseq
      %v452 = vshrl.u32 %v451, 7
      %v453 = vsub.s32 3, %v452
      %v454 = vrot.slane %v285, %v453
      %456 = vbcast.lane.b32.xlu0 %v454, 256
      %v457 = vpop.permute.xlu0 %456
      %s459 = sor.u32 256, 8
      %460 = vbcast.lane.b32.xlu0 %v454, %s459
      %v461 = vpop.permute.xlu0 %460
      %v462 = vlaneseq
      %v463 = vshrl.u32 %v462, 7
      %v464 = vsub.s32 4, %v463
      %v465 = vrot.slane %v285, %v464
      %467 = vbcast.lane.b32.xlu0 %v465, 256
      %v468 = vpop.permute.xlu0 %467
      %s470 = sor.u32 256, 8
      %471 = vbcast.lane.b32.xlu0 %v465, %s470
      %v472 = vpop.permute.xlu0 %471
      %v473 = vlaneseq
      %v474 = vshrl.u32 %v473, 7
      %v475 = vsub.s32 5, %v474
      %v476 = vrot.slane %v285, %v475
      %478 = vbcast.lane.b32.xlu0 %v476, 256
      %v479 = vpop.permute.xlu0 %478
      %s481 = sor.u32 256, 8
      %482 = vbcast.lane.b32.xlu0 %v476, %s481
      %v483 = vpop.permute.xlu0 %482
      %v484 = vlaneseq
      %v485 = vshrl.u32 %v484, 7
      %v486 = vsub.s32 6, %v485
      %v487 = vrot.slane %v285, %v486
      %489 = vbcast.lane.b32.xlu0 %v487, 256
      %v490 = vpop.permute.xlu0 %489
      %s492 = sor.u32 256, 8
      %493 = vbcast.lane.b32.xlu0 %v487, %s492
      %v494 = vpop.permute.xlu0 %493
      %v495 = vlaneseq
      %v496 = vshrl.u32 %v495, 7
      %v497 = vsub.s32 7, %v496
      %v498 = vrot.slane %v285, %v497
      %500 = vbcast.lane.b32.xlu0 %v498, 256
      %v501 = vpop.permute.xlu0 %500
      %s503 = sor.u32 256, 8
      %504 = vbcast.lane.b32.xlu0 %v498, %s503
      %v505 = vpop.permute.xlu0 %504
      %v506 = vlaneseq
      %v507 = vshrl.u32 %v506, 7
      %v508 = vsub.s32 0, %v507
      %v509 = vrot.slane %v286, %v508
      %511 = vbcast.lane.b32.xlu0 %v509, 256
      %v512 = vpop.permute.xlu0 %511
      %s514 = sor.u32 256, 8
      %515 = vbcast.lane.b32.xlu0 %v509, %s514
      %v516 = vpop.permute.xlu0 %515
      %v517 = vlaneseq
      %v518 = vshrl.u32 %v517, 7
      %v519 = vsub.s32 1, %v518
      %v520 = vrot.slane %v286, %v519
      %522 = vbcast.lane.b32.xlu0 %v520, 256
      %v523 = vpop.permute.xlu0 %522
      %s525 = sor.u32 256, 8
      %526 = vbcast.lane.b32.xlu0 %v520, %s525
      %v527 = vpop.permute.xlu0 %526
      %v528 = vlaneseq
      %v529 = vshrl.u32 %v528, 7
      %v530 = vsub.s32 2, %v529
      %v531 = vrot.slane %v286, %v530
      %533 = vbcast.lane.b32.xlu0 %v531, 256
      %v534 = vpop.permute.xlu0 %533
      %s536 = sor.u32 256, 8
      %537 = vbcast.lane.b32.xlu0 %v531, %s536
      %v538 = vpop.permute.xlu0 %537
      %v539 = vlaneseq
      %v540 = vshrl.u32 %v539, 7
      %v541 = vsub.s32 3, %v540
      %v542 = vrot.slane %v286, %v541
      %544 = vbcast.lane.b32.xlu0 %v542, 256
      %v545 = vpop.permute.xlu0 %544
      %s547 = sor.u32 256, 8
      %548 = vbcast.lane.b32.xlu0 %v542, %s547
      %v549 = vpop.permute.xlu0 %548
      %v550 = vlaneseq
      %v551 = vshrl.u32 %v550, 7
      %v552 = vsub.s32 4, %v551
      %v553 = vrot.slane %v286, %v552
      %555 = vbcast.lane.b32.xlu0 %v553, 256
      %v556 = vpop.permute.xlu0 %555
      %s558 = sor.u32 256, 8
      %559 = vbcast.lane.b32.xlu0 %v553, %s558
      %v560 = vpop.permute.xlu0 %559
      %v561 = vlaneseq
      %v562 = vshrl.u32 %v561, 7
      %v563 = vsub.s32 5, %v562
      %v564 = vrot.slane %v286, %v563
      %566 = vbcast.lane.b32.xlu0 %v564, 256
      %v567 = vpop.permute.xlu0 %566
      %s569 = sor.u32 256, 8
      %570 = vbcast.lane.b32.xlu0 %v564, %s569
      %v571 = vpop.permute.xlu0 %570
      %v572 = vlaneseq
      %v573 = vshrl.u32 %v572, 7
      %v574 = vsub.s32 6, %v573
      %v575 = vrot.slane %v286, %v574
      %577 = vbcast.lane.b32.xlu0 %v575, 256
      %v578 = vpop.permute.xlu0 %577
      %s580 = sor.u32 256, 8
      %581 = vbcast.lane.b32.xlu0 %v575, %s580
      %v582 = vpop.permute.xlu0 %581
      %v583 = vlaneseq
      %v584 = vshrl.u32 %v583, 7
      %v585 = vsub.s32 7, %v584
      %v586 = vrot.slane %v286, %v585
      %588 = vbcast.lane.b32.xlu0 %v586, 256
      %v589 = vpop.permute.xlu0 %588
      %s591 = sor.u32 256, 8
      %592 = vbcast.lane.b32.xlu0 %v586, %s591
      %v593 = vpop.permute.xlu0 %592
      %v594 = vmul.f32 %v424, %v416
      %v595 = vmul.f32 %v428, %v417
      %v596 = vmul.f32 %v435, %v416
      %v597 = vmul.f32 %v439, %v417
      %v598 = vmul.f32 %v446, %v416
      %v599 = vmul.f32 %v450, %v417
      %v600 = vmul.f32 %v457, %v416
      %v601 = vmul.f32 %v461, %v417
      %v602 = vmul.f32 %v468, %v416
      %v603 = vmul.f32 %v472, %v417
      %v604 = vmul.f32 %v479, %v416
      %v605 = vmul.f32 %v483, %v417
      %v606 = vmul.f32 %v490, %v416
      %v607 = vmul.f32 %v494, %v417
      %v608 = vmul.f32 %v501, %v416
      %v609 = vmul.f32 %v505, %v417
      %v610 = vmul.f32 %v512, %v416
      %v611 = vmul.f32 %v516, %v417
      %v612 = vmul.f32 %v523, %v416
      %v613 = vmul.f32 %v527, %v417
      %v614 = vmul.f32 %v534, %v416
      %v615 = vmul.f32 %v538, %v417
      %v616 = vmul.f32 %v545, %v416
      %v617 = vmul.f32 %v549, %v417
      %v618 = vmul.f32 %v556, %v416
      %v619 = vmul.f32 %v560, %v417
      %v620 = vmul.f32 %v567, %v416
      %v621 = vmul.f32 %v571, %v417
      %v622 = vmul.f32 %v578, %v416
      %v623 = vmul.f32 %v582, %v417
      %v624 = vmul.f32 %v589, %v416
      %v625 = vmul.f32 %v593, %v417
      %v626 = vmax.f32 %v594, %v595
      %v627 = vrot.slane %v626, 4
      %v628 = vmax.f32 %v626, %v627
      %v629 = vrot.slane %v628, 2
      %v630 = vmax.f32 %v628, %v629
      %v631 = vrot.slane %v630, 1
      %v632 = vmax.f32 %v630, %v631
      %v633 = vmax.f32 %v596, %v597
      %v634 = vrot.slane %v633, 4
      %v635 = vmax.f32 %v633, %v634
      %v636 = vrot.slane %v635, 2
      %v637 = vmax.f32 %v635, %v636
      %v638 = vrot.slane %v637, 1
      %v639 = vmax.f32 %v637, %v638
      %v640 = vmax.f32 %v598, %v599
      %v641 = vrot.slane %v640, 4
      %v642 = vmax.f32 %v640, %v641
      %v643 = vrot.slane %v642, 2
      %v644 = vmax.f32 %v642, %v643
      %v645 = vrot.slane %v644, 1
      %v646 = vmax.f32 %v644, %v645
      %v647 = vmax.f32 %v600, %v601
      %v648 = vrot.slane %v647, 4
      %v649 = vmax.f32 %v647, %v648
      %v650 = vrot.slane %v649, 2
      %v651 = vmax.f32 %v649, %v650
      %v652 = vrot.slane %v651, 1
      %v653 = vmax.f32 %v651, %v652
      %v654 = vmax.f32 %v602, %v603
      %v655 = vrot.slane %v654, 4
      %v656 = vmax.f32 %v654, %v655
      %v657 = vrot.slane %v656, 2
      %v658 = vmax.f32 %v656, %v657
      %v659 = vrot.slane %v658, 1
      %v660 = vmax.f32 %v658, %v659
      %v661 = vmax.f32 %v604, %v605
      %v662 = vrot.slane %v661, 4
      %v663 = vmax.f32 %v661, %v662
      %v664 = vrot.slane %v663, 2
      %v665 = vmax.f32 %v663, %v664
      %v666 = vrot.slane %v665, 1
      %v667 = vmax.f32 %v665, %v666
      %v668 = vmax.f32 %v606, %v607
      %v669 = vrot.slane %v668, 4
      %v670 = vmax.f32 %v668, %v669
      %v671 = vrot.slane %v670, 2
      %v672 = vmax.f32 %v670, %v671
      %v673 = vrot.slane %v672, 1
      %v674 = vmax.f32 %v672, %v673
      %v675 = vmax.f32 %v608, %v609
      %v676 = vrot.slane %v675, 4
      %v677 = vmax.f32 %v675, %v676
      %v678 = vrot.slane %v677, 2
      %v679 = vmax.f32 %v677, %v678
      %v680 = vrot.slane %v679, 1
      %v681 = vmax.f32 %v679, %v680
      %v682 = vmax.f32 %v610, %v611
      %v683 = vrot.slane %v682, 4
      %v684 = vmax.f32 %v682, %v683
      %v685 = vrot.slane %v684, 2
      %v686 = vmax.f32 %v684, %v685
      %v687 = vrot.slane %v686, 1
      %v688 = vmax.f32 %v686, %v687
      %v689 = vmax.f32 %v612, %v613
      %v690 = vrot.slane %v689, 4
      %v691 = vmax.f32 %v689, %v690
      %v692 = vrot.slane %v691, 2
      %v693 = vmax.f32 %v691, %v692
      %v694 = vrot.slane %v693, 1
      %v695 = vmax.f32 %v693, %v694
      %v696 = vmax.f32 %v614, %v615
      %v697 = vrot.slane %v696, 4
      %v698 = vmax.f32 %v696, %v697
      %v699 = vrot.slane %v698, 2
      %v700 = vmax.f32 %v698, %v699
      %v701 = vrot.slane %v700, 1
      %v702 = vmax.f32 %v700, %v701
      %v703 = vmax.f32 %v616, %v617
      %v704 = vrot.slane %v703, 4
      %v705 = vmax.f32 %v703, %v704
      %v706 = vrot.slane %v705, 2
      %v707 = vmax.f32 %v705, %v706
      %v708 = vrot.slane %v707, 1
      %v709 = vmax.f32 %v707, %v708
      %v710 = vmax.f32 %v618, %v619
      %v711 = vrot.slane %v710, 4
      %v712 = vmax.f32 %v710, %v711
      %v713 = vrot.slane %v712, 2
      %v714 = vmax.f32 %v712, %v713
      %v715 = vrot.slane %v714, 1
      %v716 = vmax.f32 %v714, %v715
      %v717 = vmax.f32 %v620, %v621
      %v718 = vrot.slane %v717, 4
      %v719 = vmax.f32 %v717, %v718
      %v720 = vrot.slane %v719, 2
      %v721 = vmax.f32 %v719, %v720
      %v722 = vrot.slane %v721, 1
      %v723 = vmax.f32 %v721, %v722
      %v724 = vmax.f32 %v622, %v623
      %v725 = vrot.slane %v724, 4
      %v726 = vmax.f32 %v724, %v725
      %v727 = vrot.slane %v726, 2
      %v728 = vmax.f32 %v726, %v727
      %v729 = vrot.slane %v728, 1
      %v730 = vmax.f32 %v728, %v729
      %v731 = vmax.f32 %v624, %v625
      %v732 = vrot.slane %v731, 4
      %v733 = vmax.f32 %v731, %v732
      %v734 = vrot.slane %v733, 2
      %v735 = vmax.f32 %v733, %v734
      %v736 = vrot.slane %v735, 1
      %v737 = vmax.f32 %v735, %v736
      %vm754 = vcmask 1041409
      %v755 = vsel %vm754, %v639, %v632
      %vm756 = vcmask 1042434
      %v757 = vsel %vm756, %v646, %v755
      %vm758 = vcmask 1043459
      %v759 = vsel %vm758, %v653, %v757
      %vm760 = vcmask 1044484
      %v761 = vsel %vm760, %v660, %v759
      %vm762 = vcmask 1045509
      %v763 = vsel %vm762, %v667, %v761
      %vm764 = vcmask 1046534
      %v765 = vsel %vm764, %v674, %v763
      %vm766 = vcmask 1047559
      %v767 = vsel %vm766, %v681, %v765
      %v768 = vsel %vm754, %v695, %v688
      %v769 = vsel %vm756, %v702, %v768
      %v770 = vsel %vm758, %v709, %v769
      %v771 = vsel %vm760, %v716, %v770
      %v772 = vsel %vm762, %v723, %v771
      %v773 = vsel %vm764, %v730, %v772
      %v774 = vsel %vm766, %v737, %v773
      %777 = vmatprep.subr.mxu0 0.0
      %778 = vmatpush1.msra.mxu0 %v320
      %779 = vmatprep.subr.mxu0 0.0
      %780 = vmatpush1.msra.mxu0 %v321
      %781 = vmatprep.subr.mxu0 0.0
      %782 = vmatpush1.msra.mxu0 %v322
      %783 = vmatprep.subr.mxu0 0.0
      %784 = vmatpush1.msra.mxu0 %v323
      %785 = vmatprep.subr.mxu0 0.0
      %786 = vmatpush1.msra.mxu0 %v324
      %787 = vmatprep.subr.mxu0 0.0
      %788 = vmatpush1.msra.mxu0 %v325
      %789 = vmatprep.subr.mxu0 0.0
      %790 = vmatpush1.msra.mxu0 %v326
      %791 = vmatprep.subr.mxu0 0.0
      %792 = vmatpush1.msra.mxu0 %v327
      %793 = vmatprep.subr.mxu0 0.0
      %794 = vmatpush1.msra.mxu0 %v328
      %795 = vmatprep.subr.mxu0 0.0
      %796 = vmatpush1.msra.mxu0 %v329
      %797 = vmatprep.subr.mxu0 0.0
      %798 = vmatpush1.msra.mxu0 %v330
      %799 = vmatprep.subr.mxu0 0.0
      %800 = vmatpush1.msra.mxu0 %v331
      %801 = vmatprep.subr.mxu0 0.0
      %802 = vmatpush1.msra.mxu0 %v332
      %803 = vmatprep.subr.mxu0 0.0
      %804 = vmatpush1.msra.mxu0 %v333
      %805 = vmatprep.subr.mxu0 0.0
      %806 = vmatpush1.msra.mxu0 %v334
      %807 = vmatprep.subr.mxu0 0.0
      %808 = vmatpush1.msra.mxu0 %v335
      %809 = vmatprep.subr.mxu0 0.0
      %810 = vmatpush1.msra.mxu0 0.0
      %811 = vmatprep.subr.mxu0 0.0
      %812 = vmatpush1.msra.mxu0 0.0
      %813 = vmatprep.subr.mxu0 0.0
      %814 = vmatpush1.msra.mxu0 0.0
      %815 = vmatprep.subr.mxu0 0.0
      %816 = vmatpush1.msra.mxu0 0.0
      %817 = vmatprep.subr.mxu0 0.0
      %818 = vmatpush1.msra.mxu0 0.0
      %819 = vmatprep.subr.mxu0 0.0
      %820 = vmatpush1.msra.mxu0 0.0
      %821 = vmatprep.subr.mxu0 0.0
      %822 = vmatpush1.msra.mxu0 0.0
      %823 = vmatprep.subr.mxu0 0.0
      %824 = vmatpush1.msra.mxu0 0.0
      %825 = vmatprep.subr.mxu0 0.0
      %826 = vmatpush1.msra.mxu0 0.0
      %827 = vmatprep.subr.mxu0 0.0
      %828 = vmatpush1.msra.mxu0 0.0
      %829 = vmatprep.subr.mxu0 0.0
      %830 = vmatpush1.msra.mxu0 0.0
      %831 = vmatprep.subr.mxu0 0.0
      %832 = vmatpush1.msra.mxu0 0.0
      %833 = vmatprep.subr.mxu0 0.0
      %834 = vmatpush1.msra.mxu0 0.0
      %835 = vmatprep.subr.mxu0 0.0
      %836 = vmatpush1.msra.mxu0 0.0
      %837 = vmatprep.subr.mxu0 0.0
      %838 = vmatpush1.msra.mxu0 0.0
      %839 = vmatprep.subr.mxu0 0.0
      %840 = vmatpush1.msra.mxu0 0.0
      %841 = vmatprep.mubr.f32.mxu0 0.0
      %842 = vmatmul.mubr.f32.gmra.mrb[0].mxu0 %v767
      %v843 = vpop.f32.mrb[0].mxu0
      %v844 = vadd.f32 0.0, %v843
      %v845 = vpop.f32.mrb[0].mxu0
      %846 = vmatprep.mubr.f32.mxu0 0.0
      %847 = vmatmul.mubr.f32.gmra.mrb[0].mxu0 %v774
      %v848 = vpop.f32.mrb[0].mxu0
      %v849 = vadd.f32 0.0, %v848
      %v850 = vpop.f32.mrb[0].mxu0
      %851 = vdwg.mxu0
      %852 = vmatprep.subr.mxu0 0.0
      %853 = vmatpush1.msra.mxu0 %v304
      %854 = vmatprep.subr.mxu0 0.0
      %855 = vmatpush1.msra.mxu0 %v305
      %856 = vmatprep.subr.mxu0 0.0
      %857 = vmatpush1.msra.mxu0 %v306
      %858 = vmatprep.subr.mxu0 0.0
      %859 = vmatpush1.msra.mxu0 %v307
      %860 = vmatprep.subr.mxu0 0.0
      %861 = vmatpush1.msra.mxu0 %v308
      %862 = vmatprep.subr.mxu0 0.0
      %863 = vmatpush1.msra.mxu0 %v309
      %864 = vmatprep.subr.mxu0 0.0
      %865 = vmatpush1.msra.mxu0 %v310
      %866 = vmatprep.subr.mxu0 0.0
      %867 = vmatpush1.msra.mxu0 %v311
      %868 = vmatprep.subr.mxu0 0.0
      %869 = vmatpush1.msra.mxu0 %v312
      %870 = vmatprep.subr.mxu0 0.0
      %871 = vmatpush1.msra.mxu0 %v313
      %872 = vmatprep.subr.mxu0 0.0
      %873 = vmatpush1.msra.mxu0 %v314
      %874 = vmatprep.subr.mxu0 0.0
      %875 = vmatpush1.msra.mxu0 %v315
      %876 = vmatprep.subr.mxu0 0.0
      %877 = vmatpush1.msra.mxu0 %v316
      %878 = vmatprep.subr.mxu0 0.0
      %879 = vmatpush1.msra.mxu0 %v317
      %880 = vmatprep.subr.mxu0 0.0
      %881 = vmatpush1.msra.mxu0 %v318
      %882 = vmatprep.subr.mxu0 0.0
      %883 = vmatpush1.msra.mxu0 %v319
      %884 = vmatprep.subr.mxu0 0.0
      %885 = vmatpush1.msra.mxu0 0.0
      %886 = vmatprep.subr.mxu0 0.0
      %887 = vmatpush1.msra.mxu0 0.0
      %888 = vmatprep.subr.mxu0 0.0
      %889 = vmatpush1.msra.mxu0 0.0
      %890 = vmatprep.subr.mxu0 0.0
      %891 = vmatpush1.msra.mxu0 0.0
      %892 = vmatprep.subr.mxu0 0.0
      %893 = vmatpush1.msra.mxu0 0.0
      %894 = vmatprep.subr.mxu0 0.0
      %895 = vmatpush1.msra.mxu0 0.0
      %896 = vmatprep.subr.mxu0 0.0
      %897 = vmatpush1.msra.mxu0 0.0
      %898 = vmatprep.subr.mxu0 0.0
      %899 = vmatpush1.msra.mxu0 0.0
      %900 = vmatprep.subr.mxu0 0.0
      %901 = vmatpush1.msra.mxu0 0.0
      %902 = vmatprep.subr.mxu0 0.0
      %903 = vmatpush1.msra.mxu0 0.0
      %904 = vmatprep.subr.mxu0 0.0
      %905 = vmatpush1.msra.mxu0 0.0
      %906 = vmatprep.subr.mxu0 0.0
      %907 = vmatpush1.msra.mxu0 0.0
      %908 = vmatprep.subr.mxu0 0.0
      %909 = vmatpush1.msra.mxu0 0.0
      %910 = vmatprep.subr.mxu0 0.0
      %911 = vmatpush1.msra.mxu0 0.0
      %912 = vmatprep.subr.mxu0 0.0
      %913 = vmatpush1.msra.mxu0 0.0
      %914 = vmatprep.subr.mxu0 0.0
      %915 = vmatpush1.msra.mxu0 0.0
      %916 = vmatprep.mubr.f32.mxu0 0.0
      %917 = vmatmul.mubr.f32.gmra.mrb[0].mxu0 %v283
      %v918 = vpop.f32.mrb[0].mxu0
      %v919 = vadd.f32 %v844, %v918
      %v920 = vpop.f32.mrb[0].mxu0
      %921 = vmatprep.mubr.f32.mxu0 0.0
      %922 = vmatmul.mubr.f32.gmra.mrb[0].mxu0 %v284
      %v923 = vpop.f32.mrb[0].mxu0
      %v924 = vadd.f32 %v849, %v923
      %v925 = vpop.f32.mrb[0].mxu0
      %926 = vdwg.mxu0
      %v927 = vlaneseq
      %v928 = vshrl.u32 %v927, 7
      %v929 = vsub.s32 0, %v928
      %v930 = vrot.slane %v336, %v929
      %v931 = vadd.f32 %v919, %v930
      %v932 = vadd.f32 %v924, %v930
      %v933 = vmax.f32 %v931, 0.0
      %v934 = vmax.f32 %v932, 0.0
      %v935 = vld [vmem:[%s4 + $0x190] sm:$0xff]
      %v936 = vld [vmem:[%s4 + $0x198] sm:$0xff]
      %v937 = vld [vmem:[%s4 + $0x1a0] sm:$0xff]
      %v938 = vld [vmem:[%s4 + $0x1a8] sm:$0xff]
      %v939 = vld [vmem:[%s4 + $0x1b0] sm:$0xff]
      %v940 = vld [vmem:[%s4 + $0x1b8] sm:$0xff]
      %v941 = vld [vmem:[%s4 + $0x1c0] sm:$0xff]
      %v942 = vld [vmem:[%s4 + $0x1c8] sm:$0xff]
      %v943 = vld [vmem:[%s4 + $0x1d0] sm:$0xff]
      %v944 = vld [vmem:[%s4 + $0x1d8] sm:$0xff]
      %v945 = vld [vmem:[%s4 + $0x1e0] sm:$0xff]
      %v946 = vld [vmem:[%s4 + $0x1e8] sm:$0xff]
      %v947 = vld [vmem:[%s4 + $0x1f0] sm:$0xff]
      %v948 = vld [vmem:[%s4 + $0x1f8] sm:$0xff]
      %v949 = vld [vmem:[%s4 + $0x200] sm:$0xff]
      %v950 = vld [vmem:[%s4 + $0x208] sm:$0xff]
      %v951 = vld [vmem:[%s4 + $0x210] sm:$0x1]
      %v952 = vld [vmem:[%s4 + $0x218] sm:$0xff]
      %v953 = vld [vmem:[%s4 + $0x220] sm:$0xff]
      %v954 = vld [vmem:[%s4 + $0x228] sm:$0xff]
      %v955 = vld [vmem:[%s4 + $0x230] sm:$0xff]
      %v956 = vld [vmem:[%s4 + $0x238] sm:$0xff]
      %v957 = vld [vmem:[%s4 + $0x240] sm:$0xff]
      %v958 = vld [vmem:[%s4 + $0x248] sm:$0xff]
      %v959 = vld [vmem:[%s4 + $0x250] sm:$0xff]
      %v960 = vld [vmem:[%s4 + $0x258] sm:$0xff]
      %v961 = vld [vmem:[%s4 + $0x260] sm:$0xff]
      %v962 = vld [vmem:[%s4 + $0x268] sm:$0xff]
      %v963 = vld [vmem:[%s4 + $0x270] sm:$0xff]
      %v964 = vld [vmem:[%s4 + $0x278] sm:$0xff]
      %v965 = vld [vmem:[%s4 + $0x280] sm:$0xff]
      %v966 = vld [vmem:[%s4 + $0x288] sm:$0xff]
      %v967 = vld [vmem:[%s4 + $0x290] sm:$0xff]
      %v968 = vld [vmem:[%s4 + $0x298] sm:$0xff]
      %v969 = vld [vmem:[%s4 + $0x2a0] sm:$0xff]
      %v970 = vld [vmem:[%s4 + $0x2a8] sm:$0xff]
      %v971 = vld [vmem:[%s4 + $0x2b0] sm:$0xff]
      %v972 = vld [vmem:[%s4 + $0x2b8] sm:$0xff]
      %v973 = vld [vmem:[%s4 + $0x2c0] sm:$0xff]
      %v974 = vld [vmem:[%s4 + $0x2c8] sm:$0xff]
      %v975 = vld [vmem:[%s4 + $0x2d0] sm:$0xff]
      %v976 = vld [vmem:[%s4 + $0x2d8] sm:$0xff]
      %v977 = vld [vmem:[%s4 + $0x2e0] sm:$0xff]
      %v978 = vld [vmem:[%s4 + $0x2e8] sm:$0xff]
      %v979 = vld [vmem:[%s4 + $0x2f0] sm:$0xff]
      %v980 = vld [vmem:[%s4 + $0x2f8] sm:$0xff]
      %v981 = vld [vmem:[%s4 + $0x300] sm:$0xff]
      %v982 = vld [vmem:[%s4 + $0x308] sm:$0xff]
      %v983 = vld [vmem:[%s4 + $0x310] sm:$0xff]
      %v984 = vld [vmem:[%s4 + $0x318] sm:$0x1]
      %v985 = vlaneseq
      %v986 = vshrl.u32 %v985, 7
      %v987 = vsub.s32 0, %v986
      %v988 = vrot.slane %v951, %v987
      %989 = vmatprep.subr.mxu0 0.0
      %990 = vmatpush1.msra.mxu0 %v935
      %991 = vmatprep.subr.mxu0 0.0
      %992 = vmatpush1.msra.mxu0 %v936
      %993 = vmatprep.subr.mxu0 0.0
      %994 = vmatpush1.msra.mxu0 %v937
      %995 = vmatprep.subr.mxu0 0.0
      %996 = vmatpush1.msra.mxu0 %v938
      %997 = vmatprep.subr.mxu0 0.0
      %998 = vmatpush1.msra.mxu0 %v939
      %999 = vmatprep.subr.mxu0 0.0
      %1000 = vmatpush1.msra.mxu0 %v940
      %1001 = vmatprep.subr.mxu0 0.0
      %1002 = vmatpush1.msra.mxu0 %v941
      %1003 = vmatprep.subr.mxu0 0.0
      %1004 = vmatpush1.msra.mxu0 %v942
      %1005 = vmatprep.subr.mxu0 0.0
      %1006 = vmatpush1.msra.mxu0 %v943
      %1007 = vmatprep.subr.mxu0 0.0
      %1008 = vmatpush1.msra.mxu0 %v944
      %1009 = vmatprep.subr.mxu0 0.0
      %1010 = vmatpush1.msra.mxu0 %v945
      %1011 = vmatprep.subr.mxu0 0.0
      %1012 = vmatpush1.msra.mxu0 %v946
      %1013 = vmatprep.subr.mxu0 0.0
      %1014 = vmatpush1.msra.mxu0 %v947
      %1015 = vmatprep.subr.mxu0 0.0
      %1016 = vmatpush1.msra.mxu0 %v948
      %1017 = vmatprep.subr.mxu0 0.0
      %1018 = vmatpush1.msra.mxu0 %v949
      %1019 = vmatprep.subr.mxu0 0.0
      %1020 = vmatpush1.msra.mxu0 %v950
      %1021 = vmatprep.subr.mxu0 0.0
      %1022 = vmatpush1.msra.mxu0 0.0
      %1023 = vmatprep.subr.mxu0 0.0
      %1024 = vmatpush1.msra.mxu0 0.0
      %1025 = vmatprep.subr.mxu0 0.0
      %1026 = vmatpush1.msra.mxu0 0.0
      %1027 = vmatprep.subr.mxu0 0.0
      %1028 = vmatpush1.msra.mxu0 0.0
      %1029 = vmatprep.subr.mxu0 0.0
      %1030 = vmatpush1.msra.mxu0 0.0
      %1031 = vmatprep.subr.mxu0 0.0
      %1032 = vmatpush1.msra.mxu0 0.0
      %1033 = vmatprep.subr.mxu0 0.0
      %1034 = vmatpush1.msra.mxu0 0.0
      %1035 = vmatprep.subr.mxu0 0.0
      %1036 = vmatpush1.msra.mxu0 0.0
      %1037 = vmatprep.subr.mxu0 0.0
      %1038 = vmatpush1.msra.mxu0 0.0
      %1039 = vmatprep.subr.mxu0 0.0
      %1040 = vmatpush1.msra.mxu0 0.0
      %1041 = vmatprep.subr.mxu0 0.0
      %1042 = vmatpush1.msra.mxu0 0.0
      %1043 = vmatprep.subr.mxu0 0.0
      %1044 = vmatpush1.msra.mxu0 0.0
      %1045 = vmatprep.subr.mxu0 0.0
      %1046 = vmatpush1.msra.mxu0 0.0
      %1047 = vmatprep.subr.mxu0 0.0
      %1048 = vmatpush1.msra.mxu0 0.0
      %1049 = vmatprep.subr.mxu0 0.0
      %1050 = vmatpush1.msra.mxu0 0.0
      %1051 = vmatprep.subr.mxu0 0.0
      %1052 = vmatpush1.msra.mxu0 0.0
      %1053 = vmatprep.mubr.f32.mxu0 0.0
      %1054 = vmatmul.mubr.f32.gmra.mrb[0].mxu0 %v933
      %v1055 = vpop.f32.mrb[0].mxu0
      %v1056 = vadd.f32 %v988, %v1055
      %v1057 = vpop.f32.mrb[0].mxu0
      %1058 = vmatprep.mubr.f32.mxu0 0.0
      %1059 = vmatmul.mubr.f32.gmra.mrb[0].mxu0 %v934
      %v1060 = vpop.f32.mrb[0].mxu0
      %v1061 = vadd.f32 %v988, %v1060
      %v1062 = vpop.f32.mrb[0].mxu0
      %1063 = vdwg.mxu0
      %v1064 = vmax.f32 %v1056, 0.0
      %v1065 = vmax.f32 %v1061, 0.0
      %v1066 = vmul.f32 %v424, %v1064
      %v1067 = vmul.f32 %v428, %v1065
      %v1068 = vmul.f32 %v435, %v1064
      %v1069 = vmul.f32 %v439, %v1065
      %v1070 = vmul.f32 %v446, %v1064
      %v1071 = vmul.f32 %v450, %v1065
      %v1072 = vmul.f32 %v457, %v1064
      %v1073 = vmul.f32 %v461, %v1065
      %v1074 = vmul.f32 %v468, %v1064
      %v1075 = vmul.f32 %v472, %v1065
      %v1076 = vmul.f32 %v479, %v1064
      %v1077 = vmul.f32 %v483, %v1065
      %v1078 = vmul.f32 %v490, %v1064
      %v1079 = vmul.f32 %v494, %v1065
      %v1080 = vmul.f32 %v501, %v1064
      %v1081 = vmul.f32 %v505, %v1065
      %v1082 = vmul.f32 %v512, %v1064
      %v1083 = vmul.f32 %v516, %v1065
      %v1084 = vmul.f32 %v523, %v1064
      %v1085 = vmul.f32 %v527, %v1065
      %v1086 = vmul.f32 %v534, %v1064
      %v1087 = vmul.f32 %v538, %v1065
      %v1088 = vmul.f32 %v545, %v1064
      %v1089 = vmul.f32 %v549, %v1065
      %v1090 = vmul.f32 %v556, %v1064
      %v1091 = vmul.f32 %v560, %v1065
      %v1092 = vmul.f32 %v567, %v1064
      %v1093 = vmul.f32 %v571, %v1065
      %v1094 = vmul.f32 %v578, %v1064
      %v1095 = vmul.f32 %v582, %v1065
      %v1096 = vmul.f32 %v589, %v1064
      %v1097 = vmul.f32 %v593, %v1065
      %v1098 = vmax.f32 %v1066, %v1067
      %v1099 = vrot.slane %v1098, 4
      %v1100 = vmax.f32 %v1098, %v1099
      %v1101 = vrot.slane %v1100, 2
      %v1102 = vmax.f32 %v1100, %v1101
      %v1103 = vrot.slane %v1102, 1
      %v1104 = vmax.f32 %v1102, %v1103
      %v1105 = vmax.f32 %v1068, %v1069
      %v1106 = vrot.slane %v1105, 4
      %v1107 = vmax.f32 %v1105, %v1106
      %v1108 = vrot.slane %v1107, 2
      %v1109 = vmax.f32 %v1107, %v1108
      %v1110 = vrot.slane %v1109, 1
      %v1111 = vmax.f32 %v1109, %v1110
      %v1112 = vmax.f32 %v1070, %v1071
      %v1113 = vrot.slane %v1112, 4
      %v1114 = vmax.f32 %v1112, %v1113
      %v1115 = vrot.slane %v1114, 2
      %v1116 = vmax.f32 %v1114, %v1115
      %v1117 = vrot.slane %v1116, 1
      %v1118 = vmax.f32 %v1116, %v1117
      %v1119 = vmax.f32 %v1072, %v1073
      %v1120 = vrot.slane %v1119, 4
      %v1121 = vmax.f32 %v1119, %v1120
      %v1122 = vrot.slane %v1121, 2
      %v1123 = vmax.f32 %v1121, %v1122
      %v1124 = vrot.slane %v1123, 1
      %v1125 = vmax.f32 %v1123, %v1124
      %v1126 = vmax.f32 %v1074, %v1075
      %v1127 = vrot.slane %v1126, 4
      %v1128 = vmax.f32 %v1126, %v1127
      %v1129 = vrot.slane %v1128, 2
      %v1130 = vmax.f32 %v1128, %v1129
      %v1131 = vrot.slane %v1130, 1
      %v1132 = vmax.f32 %v1130, %v1131
      %v1133 = vmax.f32 %v1076, %v1077
      %v1134 = vrot.slane %v1133, 4
      %v1135 = vmax.f32 %v1133, %v1134
      %v1136 = vrot.slane %v1135, 2
      %v1137 = vmax.f32 %v1135, %v1136
      %v1138 = vrot.slane %v1137, 1
      %v1139 = vmax.f32 %v1137, %v1138
      %v1140 = vmax.f32 %v1078, %v1079
      %v1141 = vrot.slane %v1140, 4
      %v1142 = vmax.f32 %v1140, %v1141
      %v1143 = vrot.slane %v1142, 2
      %v1144 = vmax.f32 %v1142, %v1143
      %v1145 = vrot.slane %v1144, 1
      %v1146 = vmax.f32 %v1144, %v1145
      %v1147 = vmax.f32 %v1080, %v1081
      %v1148 = vrot.slane %v1147, 4
      %v1149 = vmax.f32 %v1147, %v1148
      %v1150 = vrot.slane %v1149, 2
      %v1151 = vmax.f32 %v1149, %v1150
      %v1152 = vrot.slane %v1151, 1
      %v1153 = vmax.f32 %v1151, %v1152
      %v1154 = vmax.f32 %v1082, %v1083
      %v1155 = vrot.slane %v1154, 4
      %v1156 = vmax.f32 %v1154, %v1155
      %v1157 = vrot.slane %v1156, 2
      %v1158 = vmax.f32 %v1156, %v1157
      %v1159 = vrot.slane %v1158, 1
      %v1160 = vmax.f32 %v1158, %v1159
      %v1161 = vmax.f32 %v1084, %v1085
      %v1162 = vrot.slane %v1161, 4
      %v1163 = vmax.f32 %v1161, %v1162
      %v1164 = vrot.slane %v1163, 2
      %v1165 = vmax.f32 %v1163, %v1164
      %v1166 = vrot.slane %v1165, 1
      %v1167 = vmax.f32 %v1165, %v1166
      %v1168 = vmax.f32 %v1086, %v1087
      %v1169 = vrot.slane %v1168, 4
      %v1170 = vmax.f32 %v1168, %v1169
      %v1171 = vrot.slane %v1170, 2
      %v1172 = vmax.f32 %v1170, %v1171
      %v1173 = vrot.slane %v1172, 1
      %v1174 = vmax.f32 %v1172, %v1173
      %v1175 = vmax.f32 %v1088, %v1089
      %v1176 = vrot.slane %v1175, 4
      %v1177 = vmax.f32 %v1175, %v1176
      %v1178 = vrot.slane %v1177, 2
      %v1179 = vmax.f32 %v1177, %v1178
      %v1180 = vrot.slane %v1179, 1
      %v1181 = vmax.f32 %v1179, %v1180
      %v1182 = vmax.f32 %v1090, %v1091
      %v1183 = vrot.slane %v1182, 4
      %v1184 = vmax.f32 %v1182, %v1183
      %v1185 = vrot.slane %v1184, 2
      %v1186 = vmax.f32 %v1184, %v1185
      %v1187 = vrot.slane %v1186, 1
      %v1188 = vmax.f32 %v1186, %v1187
      %v1189 = vmax.f32 %v1092, %v1093
      %v1190 = vrot.slane %v1189, 4
      %v1191 = vmax.f32 %v1189, %v1190
      %v1192 = vrot.slane %v1191, 2
      %v1193 = vmax.f32 %v1191, %v1192
      %v1194 = vrot.slane %v1193, 1
      %v1195 = vmax.f32 %v1193, %v1194
      %v1196 = vmax.f32 %v1094, %v1095
      %v1197 = vrot.slane %v1196, 4
      %v1198 = vmax.f32 %v1196, %v1197
      %v1199 = vrot.slane %v1198, 2
      %v1200 = vmax.f32 %v1198, %v1199
      %v1201 = vrot.slane %v1200, 1
      %v1202 = vmax.f32 %v1200, %v1201
      %v1203 = vmax.f32 %v1096, %v1097
      %v1204 = vrot.slane %v1203, 4
      %v1205 = vmax.f32 %v1203, %v1204
      %v1206 = vrot.slane %v1205, 2
      %v1207 = vmax.f32 %v1205, %v1206
      %v1208 = vrot.slane %v1207, 1
      %v1209 = vmax.f32 %v1207, %v1208
      %v1226 = vsel %vm754, %v1111, %v1104
      %v1227 = vsel %vm756, %v1118, %v1226
      %v1228 = vsel %vm758, %v1125, %v1227
      %v1229 = vsel %vm760, %v1132, %v1228
      %v1230 = vsel %vm762, %v1139, %v1229
      %v1231 = vsel %vm764, %v1146, %v1230
      %v1232 = vsel %vm766, %v1153, %v1231
      %v1233 = vsel %vm754, %v1167, %v1160
      %v1234 = vsel %vm756, %v1174, %v1233
      %v1235 = vsel %vm758, %v1181, %v1234
      %v1236 = vsel %vm760, %v1188, %v1235
      %v1237 = vsel %vm762, %v1195, %v1236
      %v1238 = vsel %vm764, %v1202, %v1237
      %v1239 = vsel %vm766, %v1209, %v1238
      %1242 = vmatprep.subr.mxu0 0.0
      %1243 = vmatpush1.msra.mxu0 %v968
      %1244 = vmatprep.subr.mxu0 0.0
      %1245 = vmatpush1.msra.mxu0 %v969
      %1246 = vmatprep.subr.mxu0 0.0
      %1247 = vmatpush1.msra.mxu0 %v970
      %1248 = vmatprep.subr.mxu0 0.0
      %1249 = vmatpush1.msra.mxu0 %v971
      %1250 = vmatprep.subr.mxu0 0.0
      %1251 = vmatpush1.msra.mxu0 %v972
      %1252 = vmatprep.subr.mxu0 0.0
      %1253 = vmatpush1.msra.mxu0 %v973
      %1254 = vmatprep.subr.mxu0 0.0
      %1255 = vmatpush1.msra.mxu0 %v974
      %1256 = vmatprep.subr.mxu0 0.0
      %1257 = vmatpush1.msra.mxu0 %v975
      %1258 = vmatprep.subr.mxu0 0.0
      %1259 = vmatpush1.msra.mxu0 %v976
      %1260 = vmatprep.subr.mxu0 0.0
      %1261 = vmatpush1.msra.mxu0 %v977
      %1262 = vmatprep.subr.mxu0 0.0
      %1263 = vmatpush1.msra.mxu0 %v978
      %1264 = vmatprep.subr.mxu0 0.0
      %1265 = vmatpush1.msra.mxu0 %v979
      %1266 = vmatprep.subr.mxu0 0.0
      %1267 = vmatpush1.msra.mxu0 %v980
      %1268 = vmatprep.subr.mxu0 0.0
      %1269 = vmatpush1.msra.mxu0 %v981
      %1270 = vmatprep.subr.mxu0 0.0
      %1271 = vmatpush1.msra.mxu0 %v982
      %1272 = vmatprep.subr.mxu0 0.0
      %1273 = vmatpush1.msra.mxu0 %v983
      %1274 = vmatprep.subr.mxu0 0.0
      %1275 = vmatpush1.msra.mxu0 0.0
      %1276 = vmatprep.subr.mxu0 0.0
      %1277 = vmatpush1.msra.mxu0 0.0
      %1278 = vmatprep.subr.mxu0 0.0
      %1279 = vmatpush1.msra.mxu0 0.0
      %1280 = vmatprep.subr.mxu0 0.0
      %1281 = vmatpush1.msra.mxu0 0.0
      %1282 = vmatprep.subr.mxu0 0.0
      %1283 = vmatpush1.msra.mxu0 0.0
      %1284 = vmatprep.subr.mxu0 0.0
      %1285 = vmatpush1.msra.mxu0 0.0
      %1286 = vmatprep.subr.mxu0 0.0
      %1287 = vmatpush1.msra.mxu0 0.0
      %1288 = vmatprep.subr.mxu0 0.0
      %1289 = vmatpush1.msra.mxu0 0.0
      %1290 = vmatprep.subr.mxu0 0.0
      %1291 = vmatpush1.msra.mxu0 0.0
      %1292 = vmatprep.subr.mxu0 0.0
      %1293 = vmatpush1.msra.mxu0 0.0
      %1294 = vmatprep.subr.mxu0 0.0
      %1295 = vmatpush1.msra.mxu0 0.0
      %1296 = vmatprep.subr.mxu0 0.0
      %1297 = vmatpush1.msra.mxu0 0.0
      %1298 = vmatprep.subr.mxu0 0.0
      %1299 = vmatpush1.msra.mxu0 0.0
      %1300 = vmatprep.subr.mxu0 0.0
      %1301 = vmatpush1.msra.mxu0 0.0
      %1302 = vmatprep.subr.mxu0 0.0
      %1303 = vmatpush1.msra.mxu0 0.0
      %1304 = vmatprep.subr.mxu0 0.0
      %1305 = vmatpush1.msra.mxu0 0.0
      %1306 = vmatprep.mubr.f32.mxu0 0.0
      %1307 = vmatmul.mubr.f32.gmra.mrb[0].mxu0 %v1232
      %v1308 = vpop.f32.mrb[0].mxu0
      %v1309 = vadd.f32 0.0, %v1308
      %v1310 = vpop.f32.mrb[0].mxu0
      %1311 = vmatprep.mubr.f32.mxu0 0.0
      %1312 = vmatmul.mubr.f32.gmra.mrb[0].mxu0 %v1239
      %v1313 = vpop.f32.mrb[0].mxu0
      %v1314 = vadd.f32 0.0, %v1313
      %v1315 = vpop.f32.mrb[0].mxu0
      %1316 = vdwg.mxu0
      %1317 = vmatprep.subr.mxu0 0.0
      %1318 = vmatpush1.msra.mxu0 %v952
      %1319 = vmatprep.subr.mxu0 0.0
      %1320 = vmatpush1.msra.mxu0 %v953
      %1321 = vmatprep.subr.mxu0 0.0
      %1322 = vmatpush1.msra.mxu0 %v954
      %1323 = vmatprep.subr.mxu0 0.0
      %1324 = vmatpush1.msra.mxu0 %v955
      %1325 = vmatprep.subr.mxu0 0.0
      %1326 = vmatpush1.msra.mxu0 %v956
      %1327 = vmatprep.subr.mxu0 0.0
      %1328 = vmatpush1.msra.mxu0 %v957
      %1329 = vmatprep.subr.mxu0 0.0
      %1330 = vmatpush1.msra.mxu0 %v958
      %1331 = vmatprep.subr.mxu0 0.0
      %1332 = vmatpush1.msra.mxu0 %v959
      %1333 = vmatprep.subr.mxu0 0.0
      %1334 = vmatpush1.msra.mxu0 %v960
      %1335 = vmatprep.subr.mxu0 0.0
      %1336 = vmatpush1.msra.mxu0 %v961
      %1337 = vmatprep.subr.mxu0 0.0
      %1338 = vmatpush1.msra.mxu0 %v962
      %1339 = vmatprep.subr.mxu0 0.0
      %1340 = vmatpush1.msra.mxu0 %v963
      %1341 = vmatprep.subr.mxu0 0.0
      %1342 = vmatpush1.msra.mxu0 %v964
      %1343 = vmatprep.subr.mxu0 0.0
      %1344 = vmatpush1.msra.mxu0 %v965
      %1345 = vmatprep.subr.mxu0 0.0
      %1346 = vmatpush1.msra.mxu0 %v966
      %1347 = vmatprep.subr.mxu0 0.0
      %1348 = vmatpush1.msra.mxu0 %v967
      %1349 = vmatprep.subr.mxu0 0.0
      %1350 = vmatpush1.msra.mxu0 0.0
      %1351 = vmatprep.subr.mxu0 0.0
      %1352 = vmatpush1.msra.mxu0 0.0
      %1353 = vmatprep.subr.mxu0 0.0
      %1354 = vmatpush1.msra.mxu0 0.0
      %1355 = vmatprep.subr.mxu0 0.0
      %1356 = vmatpush1.msra.mxu0 0.0
      %1357 = vmatprep.subr.mxu0 0.0
      %1358 = vmatpush1.msra.mxu0 0.0
      %1359 = vmatprep.subr.mxu0 0.0
      %1360 = vmatpush1.msra.mxu0 0.0
      %1361 = vmatprep.subr.mxu0 0.0
      %1362 = vmatpush1.msra.mxu0 0.0
      %1363 = vmatprep.subr.mxu0 0.0
      %1364 = vmatpush1.msra.mxu0 0.0
      %1365 = vmatprep.subr.mxu0 0.0
      %1366 = vmatpush1.msra.mxu0 0.0
      %1367 = vmatprep.subr.mxu0 0.0
      %1368 = vmatpush1.msra.mxu0 0.0
      %1369 = vmatprep.subr.mxu0 0.0
      %1370 = vmatpush1.msra.mxu0 0.0
      %1371 = vmatprep.subr.mxu0 0.0
      %1372 = vmatpush1.msra.mxu0 0.0
      %1373 = vmatprep.subr.mxu0 0.0
      %1374 = vmatpush1.msra.mxu0 0.0
      %1375 = vmatprep.subr.mxu0 0.0
      %1376 = vmatpush1.msra.mxu0 0.0
      %1377 = vmatprep.subr.mxu0 0.0
      %1378 = vmatpush1.msra.mxu0 0.0
      %1379 = vmatprep.subr.mxu0 0.0
      %1380 = vmatpush1.msra.mxu0 0.0
      %1381 = vmatprep.mubr.f32.mxu0 0.0
      %1382 = vmatmul.mubr.f32.gmra.mrb[0].mxu0 %v933
      %v1383 = vpop.f32.mrb[0].mxu0
      %v1384 = vadd.f32 %v1309, %v1383
      %v1385 = vpop.f32.mrb[0].mxu0
      %1386 = vmatprep.mubr.f32.mxu0 0.0
      %1387 = vmatmul.mubr.f32.gmra.mrb[0].mxu0 %v934
      %v1388 = vpop.f32.mrb[0].mxu0
      %v1389 = vadd.f32 %v1314, %v1388
      %v1390 = vpop.f32.mrb[0].mxu0
      %1391 = vdwg.mxu0
      %v1392 = vlaneseq
      %v1393 = vshrl.u32 %v1392, 7
      %v1394 = vsub.s32 0, %v1393
      %v1395 = vrot.slane %v984, %v1394
      %v1396 = vadd.f32 %v1384, %v1395
      %v1397 = vadd.f32 %v1389, %v1395
      %v1398 = vld [vmem:[%s273] sm:$0xff]
      %v1399 = vld [vmem:[%s273 + $0x8] sm:$0xff]
      %v1400 = vld [vmem:[%s273 + $0x10] sm:$0xff]
      %v1401 = vld [vmem:[%s273 + $0x18] sm:$0xff]
      %v1402 = vld [vmem:[%s273 + $0x20] sm:$0xff]
      %v1403 = vld [vmem:[%s273 + $0x28] sm:$0xff]
      %v1404 = vld [vmem:[%s273 + $0x30] sm:$0xff]
      %v1405 = vld [vmem:[%s273 + $0x38] sm:$0xff]
      %v1406 = vld [vmem:[%s273 + $0x40] sm:$0xff]
      %v1407 = vld [vmem:[%s273 + $0x48] sm:$0xff]
      %v1408 = vld [vmem:[%s273 + $0x50] sm:$0xff]
      %v1409 = vld [vmem:[%s273 + $0x58] sm:$0xff]
      %v1410 = vld [vmem:[%s273 + $0x60] sm:$0xff]
      %v1411 = vld [vmem:[%s273 + $0x68] sm:$0xff]
      %v1412 = vld [vmem:[%s273 + $0x70] sm:$0xff]
      %v1413 = vld [vmem:[%s273 + $0x78] sm:$0xff]
      %vm1414 = vcmask 130048
      %v1416 = vsel %vm1414, %v1398, 0
      %v1419 = vsel %vm1414, %v1399, 0
      %v1422 = vsel %vm1414, %v1400, 0
      %v1425 = vsel %vm1414, %v1401, 0
      %v1428 = vsel %vm1414, %v1402, 0
      %v1431 = vsel %vm1414, %v1403, 0
      %v1434 = vsel %vm1414, %v1404, 0
      %v1437 = vsel %vm1414, %v1405, 0
      %v1440 = vsel %vm1414, %v1406, 0
      %v1443 = vsel %vm1414, %v1407, 0
      %v1446 = vsel %vm1414, %v1408, 0
      %v1449 = vsel %vm1414, %v1409, 0
      %v1452 = vsel %vm1414, %v1410, 0
      %v1455 = vsel %vm1414, %v1411, 0
      %v1458 = vsel %vm1414, %v1412, 0
      %v1461 = vsel %vm1414, %v1413, 0
      %1463 = vmatprep.subr.mxu0 0.0
      %1464 = vmatpush1.msra.mxu0 %v1396
      %1465 = vmatprep.subr.mxu0 0.0
      %1466 = vmatpush1.msra.mxu0 %v1397
      %1467 = vmatprep.subr.mxu0 0.0
      %1468 = vmatpush1.msra.mxu0 0.0
      %1469 = vmatprep.subr.mxu0 0.0
      %1470 = vmatpush1.msra.mxu0 0.0
      %1471 = vmatprep.subr.mxu0 0.0
      %1472 = vmatpush1.msra.mxu0 0.0
      %1473 = vmatprep.subr.mxu0 0.0
      %1474 = vmatpush1.msra.mxu0 0.0
      %1475 = vmatprep.subr.mxu0 0.0
      %1476 = vmatpush1.msra.mxu0 0.0
      %1477 = vmatprep.subr.mxu0 0.0
      %1478 = vmatpush1.msra.mxu0 0.0
      %1479 = vmatprep.subr.mxu0 0.0
      %1480 = vmatpush1.msra.mxu0 0.0
      %1481 = vmatprep.subr.mxu0 0.0
      %1482 = vmatpush1.msra.mxu0 0.0
      %1483 = vmatprep.subr.mxu0 0.0
      %1484 = vmatpush1.msra.mxu0 0.0
      %1485 = vmatprep.subr.mxu0 0.0
      %1486 = vmatpush1.msra.mxu0 0.0
      %1487 = vmatprep.subr.mxu0 0.0
      %1488 = vmatpush1.msra.mxu0 0.0
      %1489 = vmatprep.subr.mxu0 0.0
      %1490 = vmatpush1.msra.mxu0 0.0
      %1491 = vmatprep.subr.mxu0 0.0
      %1492 = vmatpush1.msra.mxu0 0.0
      %1493 = vmatprep.subr.mxu0 0.0
      %1494 = vmatpush1.msra.mxu0 0.0
      %1495 = vmatprep.subr.mxu0 0.0
      %1496 = vmatpush1.msra.mxu0 0.0
      %1497 = vmatprep.subr.mxu0 0.0
      %1498 = vmatpush1.msra.mxu0 0.0
      %1499 = vmatprep.subr.mxu0 0.0
      %1500 = vmatpush1.msra.mxu0 0.0
      %1501 = vmatprep.subr.mxu0 0.0
      %1502 = vmatpush1.msra.mxu0 0.0
      %1503 = vmatprep.subr.mxu0 0.0
      %1504 = vmatpush1.msra.mxu0 0.0
      %1505 = vmatprep.subr.mxu0 0.0
      %1506 = vmatpush1.msra.mxu0 0.0
      %1507 = vmatprep.subr.mxu0 0.0
      %1508 = vmatpush1.msra.mxu0 0.0
      %1509 = vmatprep.subr.mxu0 0.0
      %1510 = vmatpush1.msra.mxu0 0.0
      %1511 = vmatprep.subr.mxu0 0.0
      %1512 = vmatpush1.msra.mxu0 0.0
      %1513 = vmatprep.subr.mxu0 0.0
      %1514 = vmatpush1.msra.mxu0 0.0
      %1515 = vmatprep.subr.mxu0 0.0
      %1516 = vmatpush1.msra.mxu0 0.0
      %1517 = vmatprep.subr.mxu0 0.0
      %1518 = vmatpush1.msra.mxu0 0.0
      %1519 = vmatprep.subr.mxu0 0.0
      %1520 = vmatpush1.msra.mxu0 0.0
      %1521 = vmatprep.subr.mxu0 0.0
      %1522 = vmatpush1.msra.mxu0 0.0
      %1523 = vmatprep.subr.mxu0 0.0
      %1524 = vmatpush1.msra.mxu0 0.0
      %1525 = vmatprep.subr.mxu0 0.0
      %1526 = vmatpush1.msra.mxu0 0.0
      %1527 = vmatprep.mubr.f32.mxu0 0.0
      %1528 = vmatmul.mubr.f32.gmra.mrb[0].mxu0 %v1416
      %v1529 = vpop.f32.mrb[0].mxu0
      %v1530 = vadd.f32 0.0, %v1529
      %v1531 = vpop.f32.mrb[0].mxu0
      %1532 = vmatprep.mubr.f32.mxu0 0.0
      %1533 = vmatmul.mubr.f32.gmra.mrb[0].mxu0 %v1419
      %v1534 = vpop.f32.mrb[0].mxu0
      %v1535 = vadd.f32 0.0, %v1534
      %v1536 = vpop.f32.mrb[0].mxu0
      %1537 = vmatprep.mubr.f32.mxu0 0.0
      %1538 = vmatmul.mubr.f32.gmra.mrb[0].mxu0 %v1422
      %v1539 = vpop.f32.mrb[0].mxu0
      %v1540 = vadd.f32 0.0, %v1539
      %v1541 = vpop.f32.mrb[0].mxu0
      %1542 = vmatprep.mubr.f32.mxu0 0.0
      %1543 = vmatmul.mubr.f32.gmra.mrb[0].mxu0 %v1425
      %v1544 = vpop.f32.mrb[0].mxu0
      %v1545 = vadd.f32 0.0, %v1544
      %v1546 = vpop.f32.mrb[0].mxu0
      %1547 = vmatprep.mubr.f32.mxu0 0.0
      %1548 = vmatmul.mubr.f32.gmra.mrb[0].mxu0 %v1428
      %v1549 = vpop.f32.mrb[0].mxu0
      %v1550 = vadd.f32 0.0, %v1549
      %v1551 = vpop.f32.mrb[0].mxu0
      %1552 = vmatprep.mubr.f32.mxu0 0.0
      %1553 = vmatmul.mubr.f32.gmra.mrb[0].mxu0 %v1431
      %v1554 = vpop.f32.mrb[0].mxu0
      %v1555 = vadd.f32 0.0, %v1554
      %v1556 = vpop.f32.mrb[0].mxu0
      %1557 = vmatprep.mubr.f32.mxu0 0.0
      %1558 = vmatmul.mubr.f32.gmra.mrb[0].mxu0 %v1434
      %v1559 = vpop.f32.mrb[0].mxu0
      %v1560 = vadd.f32 0.0, %v1559
      %v1561 = vpop.f32.mrb[0].mxu0
      %1562 = vmatprep.mubr.f32.mxu0 0.0
      %1563 = vmatmul.mubr.f32.gmra.mrb[0].mxu0 %v1437
      %v1564 = vpop.f32.mrb[0].mxu0
      %v1565 = vadd.f32 0.0, %v1564
      %v1566 = vpop.f32.mrb[0].mxu0
      %1567 = vmatprep.mubr.f32.mxu0 0.0
      %1568 = vmatmul.mubr.f32.gmra.mrb[0].mxu0 %v1440
      %v1569 = vpop.f32.mrb[0].mxu0
      %v1570 = vadd.f32 0.0, %v1569
      %v1571 = vpop.f32.mrb[0].mxu0
      %1572 = vmatprep.mubr.f32.mxu0 0.0
      %1573 = vmatmul.mubr.f32.gmra.mrb[0].mxu0 %v1443
      %v1574 = vpop.f32.mrb[0].mxu0
      %v1575 = vadd.f32 0.0, %v1574
      %v1576 = vpop.f32.mrb[0].mxu0
      %1577 = vmatprep.mubr.f32.mxu0 0.0
      %1578 = vmatmul.mubr.f32.gmra.mrb[0].mxu0 %v1446
      %v1579 = vpop.f32.mrb[0].mxu0
      %v1580 = vadd.f32 0.0, %v1579
      %v1581 = vpop.f32.mrb[0].mxu0
      %1582 = vmatprep.mubr.f32.mxu0 0.0
      %1583 = vmatmul.mubr.f32.gmra.mrb[0].mxu0 %v1449
      %v1584 = vpop.f32.mrb[0].mxu0
      %v1585 = vadd.f32 0.0, %v1584
      %v1586 = vpop.f32.mrb[0].mxu0
      %1587 = vmatprep.mubr.f32.mxu0 0.0
      %1588 = vmatmul.mubr.f32.gmra.mrb[0].mxu0 %v1452
      %v1589 = vpop.f32.mrb[0].mxu0
      %v1590 = vadd.f32 0.0, %v1589
      %v1591 = vpop.f32.mrb[0].mxu0
      %1592 = vmatprep.mubr.f32.mxu0 0.0
      %1593 = vmatmul.mubr.f32.gmra.mrb[0].mxu0 %v1455
      %v1594 = vpop.f32.mrb[0].mxu0
      %v1595 = vadd.f32 0.0, %v1594
      %v1596 = vpop.f32.mrb[0].mxu0
      %1597 = vmatprep.mubr.f32.mxu0 0.0
      %1598 = vmatmul.mubr.f32.gmra.mrb[0].mxu0 %v1458
      %v1599 = vpop.f32.mrb[0].mxu0
      %v1600 = vadd.f32 0.0, %v1599
      %v1601 = vpop.f32.mrb[0].mxu0
      %1602 = vmatprep.mubr.f32.mxu0 0.0
      %1603 = vmatmul.mubr.f32.gmra.mrb[0].mxu0 %v1461
      %v1604 = vpop.f32.mrb[0].mxu0
      %v1605 = vadd.f32 0.0, %v1604
      %v1606 = vpop.f32.mrb[0].mxu0
      %1607 = vdwg.mxu0
      %v1608 = vld [vmem:[%s278] sm:$0xff]
      %v1609 = vld [vmem:[%s278 + $0x8] sm:$0xff]
      %v1610 = vld [vmem:[%s278 + $0x10] sm:$0xff]
      %v1611 = vld [vmem:[%s278 + $0x18] sm:$0xff]
      %v1612 = vld [vmem:[%s278 + $0x20] sm:$0xff]
      %v1613 = vld [vmem:[%s278 + $0x28] sm:$0xff]
      %v1614 = vld [vmem:[%s278 + $0x30] sm:$0xff]
      %v1615 = vld [vmem:[%s278 + $0x38] sm:$0xff]
      %v1616 = vld [vmem:[%s278 + $0x40] sm:$0xff]
      %v1617 = vld [vmem:[%s278 + $0x48] sm:$0xff]
      %v1618 = vld [vmem:[%s278 + $0x50] sm:$0xff]
      %v1619 = vld [vmem:[%s278 + $0x58] sm:$0xff]
      %v1620 = vld [vmem:[%s278 + $0x60] sm:$0xff]
      %v1621 = vld [vmem:[%s278 + $0x68] sm:$0xff]
      %v1622 = vld [vmem:[%s278 + $0x70] sm:$0xff]
      %v1623 = vld [vmem:[%s278 + $0x78] sm:$0xff]
      %v1625 = vsel %vm1414, %v1608, 0
      %v1628 = vsel %vm1414, %v1609, 0
      %v1631 = vsel %vm1414, %v1610, 0
      %v1634 = vsel %vm1414, %v1611, 0
      %v1637 = vsel %vm1414, %v1612, 0
      %v1640 = vsel %vm1414, %v1613, 0
      %v1643 = vsel %vm1414, %v1614, 0
      %v1646 = vsel %vm1414, %v1615, 0
      %v1649 = vsel %vm1414, %v1616, 0
      %v1652 = vsel %vm1414, %v1617, 0
      %v1655 = vsel %vm1414, %v1618, 0
      %v1658 = vsel %vm1414, %v1619, 0
      %v1661 = vsel %vm1414, %v1620, 0
      %v1664 = vsel %vm1414, %v1621, 0
      %v1667 = vsel %vm1414, %v1622, 0
      %v1670 = vsel %vm1414, %v1623, 0
      %1672 = vmatprep.subr.mxu0 0.0
      %1673 = vmatpush1.msra.mxu0 %v1396
      %1674 = vmatprep.subr.mxu0 0.0
      %1675 = vmatpush1.msra.mxu0 %v1397
      %1676 = vmatprep.subr.mxu0 0.0
      %1677 = vmatpush1.msra.mxu0 0.0
      %1678 = vmatprep.subr.mxu0 0.0
      %1679 = vmatpush1.msra.mxu0 0.0
      %1680 = vmatprep.subr.mxu0 0.0
      %1681 = vmatpush1.msra.mxu0 0.0
      %1682 = vmatprep.subr.mxu0 0.0
      %1683 = vmatpush1.msra.mxu0 0.0
      %1684 = vmatprep.subr.mxu0 0.0
      %1685 = vmatpush1.msra.mxu0 0.0
      %1686 = vmatprep.subr.mxu0 0.0
      %1687 = vmatpush1.msra.mxu0 0.0
      %1688 = vmatprep.subr.mxu0 0.0
      %1689 = vmatpush1.msra.mxu0 0.0
      %1690 = vmatprep.subr.mxu0 0.0
      %1691 = vmatpush1.msra.mxu0 0.0
      %1692 = vmatprep.subr.mxu0 0.0
      %1693 = vmatpush1.msra.mxu0 0.0
      %1694 = vmatprep.subr.mxu0 0.0
      %1695 = vmatpush1.msra.mxu0 0.0
      %1696 = vmatprep.subr.mxu0 0.0
      %1697 = vmatpush1.msra.mxu0 0.0
      %1698 = vmatprep.subr.mxu0 0.0
      %1699 = vmatpush1.msra.mxu0 0.0
      %1700 = vmatprep.subr.mxu0 0.0
      %1701 = vmatpush1.msra.mxu0 0.0
      %1702 = vmatprep.subr.mxu0 0.0
      %1703 = vmatpush1.msra.mxu0 0.0
      %1704 = vmatprep.subr.mxu0 0.0
      %1705 = vmatpush1.msra.mxu0 0.0
      %1706 = vmatprep.subr.mxu0 0.0
      %1707 = vmatpush1.msra.mxu0 0.0
      %1708 = vmatprep.subr.mxu0 0.0
      %1709 = vmatpush1.msra.mxu0 0.0
      %1710 = vmatprep.subr.mxu0 0.0
      %1711 = vmatpush1.msra.mxu0 0.0
      %1712 = vmatprep.subr.mxu0 0.0
      %1713 = vmatpush1.msra.mxu0 0.0
      %1714 = vmatprep.subr.mxu0 0.0
      %1715 = vmatpush1.msra.mxu0 0.0
      %1716 = vmatprep.subr.mxu0 0.0
      %1717 = vmatpush1.msra.mxu0 0.0
      %1718 = vmatprep.subr.mxu0 0.0
      %1719 = vmatpush1.msra.mxu0 0.0
      %1720 = vmatprep.subr.mxu0 0.0
      %1721 = vmatpush1.msra.mxu0 0.0
      %1722 = vmatprep.subr.mxu0 0.0
      %1723 = vmatpush1.msra.mxu0 0.0
      %1724 = vmatprep.subr.mxu0 0.0
      %1725 = vmatpush1.msra.mxu0 0.0
      %1726 = vmatprep.subr.mxu0 0.0
      %1727 = vmatpush1.msra.mxu0 0.0
      %1728 = vmatprep.subr.mxu0 0.0
      %1729 = vmatpush1.msra.mxu0 0.0
      %1730 = vmatprep.subr.mxu0 0.0
      %1731 = vmatpush1.msra.mxu0 0.0
      %1732 = vmatprep.subr.mxu0 0.0
      %1733 = vmatpush1.msra.mxu0 0.0
      %1734 = vmatprep.subr.mxu0 0.0
      %1735 = vmatpush1.msra.mxu0 0.0
      %1736 = vmatprep.mubr.f32.mxu0 0.0
      %1737 = vmatmul.mubr.f32.gmra.mrb[0].mxu0 %v1625
      %v1738 = vpop.f32.mrb[0].mxu0
      %v1739 = vadd.f32 0.0, %v1738
      %v1740 = vpop.f32.mrb[0].mxu0
      %1741 = vmatprep.mubr.f32.mxu0 0.0
      %1742 = vmatmul.mubr.f32.gmra.mrb[0].mxu0 %v1628
      %v1743 = vpop.f32.mrb[0].mxu0
      %v1744 = vadd.f32 0.0, %v1743
      %v1745 = vpop.f32.mrb[0].mxu0
      %1746 = vmatprep.mubr.f32.mxu0 0.0
      %1747 = vmatmul.mubr.f32.gmra.mrb[0].mxu0 %v1631
      %v1748 = vpop.f32.mrb[0].mxu0
      %v1749 = vadd.f32 0.0, %v1748
      %v1750 = vpop.f32.mrb[0].mxu0
      %1751 = vmatprep.mubr.f32.mxu0 0.0
      %1752 = vmatmul.mubr.f32.gmra.mrb[0].mxu0 %v1634
      %v1753 = vpop.f32.mrb[0].mxu0
      %v1754 = vadd.f32 0.0, %v1753
      %v1755 = vpop.f32.mrb[0].mxu0
      %1756 = vmatprep.mubr.f32.mxu0 0.0
      %1757 = vmatmul.mubr.f32.gmra.mrb[0].mxu0 %v1637
      %v1758 = vpop.f32.mrb[0].mxu0
      %v1759 = vadd.f32 0.0, %v1758
      %v1760 = vpop.f32.mrb[0].mxu0
      %1761 = vmatprep.mubr.f32.mxu0 0.0
      %1762 = vmatmul.mubr.f32.gmra.mrb[0].mxu0 %v1640
      %v1763 = vpop.f32.mrb[0].mxu0
      %v1764 = vadd.f32 0.0, %v1763
      %v1765 = vpop.f32.mrb[0].mxu0
      %1766 = vmatprep.mubr.f32.mxu0 0.0
      %1767 = vmatmul.mubr.f32.gmra.mrb[0].mxu0 %v1643
      %v1768 = vpop.f32.mrb[0].mxu0
      %v1769 = vadd.f32 0.0, %v1768
      %v1770 = vpop.f32.mrb[0].mxu0
      %1771 = vmatprep.mubr.f32.mxu0 0.0
      %1772 = vmatmul.mubr.f32.gmra.mrb[0].mxu0 %v1646
      %v1773 = vpop.f32.mrb[0].mxu0
      %v1774 = vadd.f32 0.0, %v1773
      %v1775 = vpop.f32.mrb[0].mxu0
      %1776 = vmatprep.mubr.f32.mxu0 0.0
      %1777 = vmatmul.mubr.f32.gmra.mrb[0].mxu0 %v1649
      %v1778 = vpop.f32.mrb[0].mxu0
      %v1779 = vadd.f32 0.0, %v1778
      %v1780 = vpop.f32.mrb[0].mxu0
      %1781 = vmatprep.mubr.f32.mxu0 0.0
      %1782 = vmatmul.mubr.f32.gmra.mrb[0].mxu0 %v1652
      %v1783 = vpop.f32.mrb[0].mxu0
      %v1784 = vadd.f32 0.0, %v1783
      %v1785 = vpop.f32.mrb[0].mxu0
      %1786 = vmatprep.mubr.f32.mxu0 0.0
      %1787 = vmatmul.mubr.f32.gmra.mrb[0].mxu0 %v1655
      %v1788 = vpop.f32.mrb[0].mxu0
      %v1789 = vadd.f32 0.0, %v1788
      %v1790 = vpop.f32.mrb[0].mxu0
      %1791 = vmatprep.mubr.f32.mxu0 0.0
      %1792 = vmatmul.mubr.f32.gmra.mrb[0].mxu0 %v1658
      %v1793 = vpop.f32.mrb[0].mxu0
      %v1794 = vadd.f32 0.0, %v1793
      %v1795 = vpop.f32.mrb[0].mxu0
      %1796 = vmatprep.mubr.f32.mxu0 0.0
      %1797 = vmatmul.mubr.f32.gmra.mrb[0].mxu0 %v1661
      %v1798 = vpop.f32.mrb[0].mxu0
      %v1799 = vadd.f32 0.0, %v1798
      %v1800 = vpop.f32.mrb[0].mxu0
      %1801 = vmatprep.mubr.f32.mxu0 0.0
      %1802 = vmatmul.mubr.f32.gmra.mrb[0].mxu0 %v1664
      %v1803 = vpop.f32.mrb[0].mxu0
      %v1804 = vadd.f32 0.0, %v1803
      %v1805 = vpop.f32.mrb[0].mxu0
      %1806 = vmatprep.mubr.f32.mxu0 0.0
      %1807 = vmatmul.mubr.f32.gmra.mrb[0].mxu0 %v1667
      %v1808 = vpop.f32.mrb[0].mxu0
      %v1809 = vadd.f32 0.0, %v1808
      %v1810 = vpop.f32.mrb[0].mxu0
      %1811 = vmatprep.mubr.f32.mxu0 0.0
      %1812 = vmatmul.mubr.f32.gmra.mrb[0].mxu0 %v1670
      %v1813 = vpop.f32.mrb[0].mxu0
      %v1814 = vadd.f32 0.0, %v1813
      %v1815 = vpop.f32.mrb[0].mxu0
      %1816 = vdwg.mxu0
      %v1817 = vmul.f32 %v1530, %v1739
      %v1818 = vmul.f32 %v1535, %v1744
      %v1819 = vmul.f32 %v1540, %v1749
      %v1820 = vmul.f32 %v1545, %v1754
      %v1821 = vmul.f32 %v1550, %v1759
      %v1822 = vmul.f32 %v1555, %v1764
      %v1823 = vmul.f32 %v1560, %v1769
      %v1824 = vmul.f32 %v1565, %v1774
      %v1825 = vmul.f32 %v1570, %v1779
      %v1826 = vmul.f32 %v1575, %v1784
      %v1827 = vmul.f32 %v1580, %v1789
      %v1828 = vmul.f32 %v1585, %v1794
      %v1829 = vmul.f32 %v1590, %v1799
      %v1830 = vmul.f32 %v1595, %v1804
      %v1831 = vmul.f32 %v1600, %v1809
      %v1832 = vmul.f32 %v1605, %v1814
      %1833 = vmatprep.subr.mxu0 0.0
      %1834 = vmatpush1.xpose.msra.mxu0 %v1817
      %1835 = vmatprep.subr.mxu0 0.0
      %1836 = vmatpush1.xpose.msra.mxu0 %v1818
      %1837 = vmatprep.subr.mxu0 0.0
      %1838 = vmatpush1.xpose.msra.mxu0 %v1819
      %1839 = vmatprep.subr.mxu0 0.0
      %1840 = vmatpush1.xpose.msra.mxu0 %v1820
      %1841 = vmatprep.subr.mxu0 0.0
      %1842 = vmatpush1.xpose.msra.mxu0 %v1821
      %1843 = vmatprep.subr.mxu0 0.0
      %1844 = vmatpush1.xpose.msra.mxu0 %v1822
      %1845 = vmatprep.subr.mxu0 0.0
      %1846 = vmatpush1.xpose.msra.mxu0 %v1823
      %1847 = vmatprep.subr.mxu0 0.0
      %1848 = vmatpush1.xpose.msra.mxu0 %v1824
      %1849 = vmatprep.subr.mxu0 0.0
      %1850 = vmatpush1.xpose.msra.mxu0 %v1825
      %1851 = vmatprep.subr.mxu0 0.0
      %1852 = vmatpush1.xpose.msra.mxu0 %v1826
      %1853 = vmatprep.subr.mxu0 0.0
      %1854 = vmatpush1.xpose.msra.mxu0 %v1827
      %1855 = vmatprep.subr.mxu0 0.0
      %1856 = vmatpush1.xpose.msra.mxu0 %v1828
      %1857 = vmatprep.subr.mxu0 0.0
      %1858 = vmatpush1.xpose.msra.mxu0 %v1829
      %1859 = vmatprep.subr.mxu0 0.0
      %1860 = vmatpush1.xpose.msra.mxu0 %v1830
      %1861 = vmatprep.subr.mxu0 0.0
      %1862 = vmatpush1.xpose.msra.mxu0 %v1831
      %1863 = vmatprep.subr.mxu0 0.0
      %1864 = vmatpush1.xpose.msra.mxu0 %v1832
      %1865 = vmatprep.subr.mxu0 0.0
      %1866 = vmatpush1.xpose.msra.mxu0 0.0
      %1867 = vmatprep.subr.mxu0 0.0
      %1868 = vmatpush1.xpose.msra.mxu0 0.0
      %1869 = vmatprep.subr.mxu0 0.0
      %1870 = vmatpush1.xpose.msra.mxu0 0.0
      %1871 = vmatprep.subr.mxu0 0.0
      %1872 = vmatpush1.xpose.msra.mxu0 0.0
      %1873 = vmatprep.subr.mxu0 0.0
      %1874 = vmatpush1.xpose.msra.mxu0 0.0
      %1875 = vmatprep.subr.mxu0 0.0
      %1876 = vmatpush1.xpose.msra.mxu0 0.0
      %1877 = vmatprep.subr.mxu0 0.0
      %1878 = vmatpush1.xpose.msra.mxu0 0.0
      %1879 = vmatprep.subr.mxu0 0.0
      %1880 = vmatpush1.xpose.msra.mxu0 0.0
      %1881 = vmatprep.subr.mxu0 0.0
      %1882 = vmatpush1.xpose.msra.mxu0 0.0
      %1883 = vmatprep.subr.mxu0 0.0
      %1884 = vmatpush1.xpose.msra.mxu0 0.0
      %1885 = vmatprep.subr.mxu0 0.0
      %1886 = vmatpush1.xpose.msra.mxu0 0.0
      %1887 = vmatprep.subr.mxu0 0.0
      %1888 = vmatpush1.xpose.msra.mxu0 0.0
      %1889 = vmatprep.subr.mxu0 0.0
      %1890 = vmatpush1.xpose.msra.mxu0 0.0
      %1891 = vmatprep.subr.mxu0 0.0
      %1892 = vmatpush1.xpose.msra.mxu0 0.0
      %1893 = vmatprep.subr.mxu0 0.0
      %1894 = vmatpush1.xpose.msra.mxu0 0.0
      %1895 = vmatprep.subr.mxu0 0.0
      %1896 = vmatpush1.xpose.msra.mxu0 0.0
      %1897 = vmatprep.mubr.f32.mxu0 0.0
      %1898 = vmatmul.mubr.f32.gmra.mrb[0].mxu0 1.0
      %v1899 = vpop.f32.mrb[0].mxu0
      %v1900 = vadd.f32 0.0, %v1899
      %v1901 = vpop.f32.mrb[0].mxu0
      %1902 = vdwg.mxu0
      %v1903 = vlaneseq
      %v1904 = vshrl.u32 %v1903, 7
      %v1905 = vsub.s32 0, %v1904
      %v1906 = vrot.slane %v1900, %v1905
      %1907 = vst [vmem:[%s282] sm:$0xff] %v1906
      %p1908 = scmp.lt.s32.totalorder %s16, 3
      %s1909 = scalar_select %p1908, %s16, 3
      %s1910 = smul.addr %s1909, 8
      %s1911 = scalar_lea.vmem %s5, %s1910
      // Predicated region
      $region41: #{_model_forward_impl.1} parent=39 // pred_check
        %p1912 = pneg %p159
      $region42: #{_model_forward_impl.1} parent=39 // pred_check_branch
        %1914 = sbr.rel (%p1912) target = $region44
      $region43: #{_model_forward_impl.1} parent=39 // pred_region
        _
      $region44: #{_model_forward_impl.1} parent=39 // pred_fallthru
        _
    $region40: #{_model_forward_impl.1} parent=5 // pred_fallthru
      _
    %p1915 = scmp.le.s32.totalorder 2, %s11
    // Predicated region
    $region45: #{_model_forward_impl.1} parent=5 // pred_check
      %p1916 = pneg %p1915
    $region46: #{_model_forward_impl.1} parent=5 // pred_check_branch
      %1918 = sbr.rel (%p1916) target = $region48
    $region47: #{_model_forward_impl.1} parent=5 // pred_region
      %s1919 = ssub.s32 %s11, 2
      // Predicated region
      $region49: #{_model_forward_impl.1} parent=47 // pred_check
        %p1920 = pneg %p165
      $region50: #{_model_forward_impl.1} parent=47 // pred_check_branch
        %1922 = sbr.rel (%p1920) target = $region52
      $region51: #{_model_forward_impl.1} parent=47 // pred_region
        %p1923 = scmp.lt.s32.totalorder %s17, 3
        %s1924 = scalar_select %p1923, %s17, 3
        %s1925 = smul.addr %s1924, 8
        %s1926 = scalar_lea.vmem %s5, %s1925
      $region52: #{_model_forward_impl.1} parent=47 // pred_fallthru
        _
    $region48: #{_model_forward_impl.1} parent=5 // pred_fallthru
      _
  $region6: #{_model_forward_impl.1} parent=0 // loop_footer
    %s15 = sadd.s32 1, %s11
  $region7: #{_model_forward_impl.1} parent=0 // loop_footer_branch
    %10 = sbr.rel target = $region3
  $region8: #{_model_forward_impl.1} parent=0 // loop_exit
    _

</llo_original>
